<compile_context>
chip_gen: v6e
topology: v6e:2x2x1
jax: 0.10.0
libtpu: 0.0.40
codegen_flags: <defaults>
</compile_context>

<pallas_src>
import functools

import jax
import jax.numpy as jnp
from jax import lax
from jax.experimental import pallas as pl
from jax.experimental.pallas import tpu as pltpu

OP_CONFIGS = [(3, 1), (3, 3), (3, 6), (5, 1), (5, 3), (5, 6)]  # (kernel_size, expand_ratio)
BN_EPS = 1e-5
LEFT = 8                     # aligned left offset of the image columns inside the xe scratch
MXU_DTYPE = jnp.bfloat16     # matmul operand dtype (MXU peak is bf16 on v5e/v6e/v7x)


# ---------------------------------------------------------------------------
# Fused MB-inverted-bottleneck kernel
# ---------------------------------------------------------------------------
def _pick_row_tile(h_out, h_in, sh, K, mid, wp_alloc, budget_bytes=8 << 20, max_rows=64):
    """Largest divisor of h_out whose expanded scratch fits the VMEM budget."""
    pad = K // 2
    lanes = ((mid + 127) // 128) * 128          # VMEM lane padding
    for d in range(min(h_out, max_rows), 0, -1):
        if h_out % d:
            continue
        if d * sh < pad:                        # only edge tiles may touch the halo
            continue
        if h_out // d > 1 and (d - 1) * sh + K > h_in:
            continue
        rows = (d - 1) * sh + K + 2 * pad
        if rows * wp_alloc * lanes * 4 <= budget_bytes:
            return d
    return h_out                                # fall back to whole image (always correct)


def _make_fused_kernel(*, H, W, C, mid, cout, K, sh, sw, TH, TH_in, n_slab,
                       bot, Wp_alloc, expand, add_residual):
    pad = K // 2
    L = LEFT
    col0 = L - pad                              # xe column of padded-image column 0
    XR = TH_in + 2 * pad                        # xe rows: window + dynamic-placement slack
    Wo = (W + 2 * pad - K) // sw + 1

    def kernel(*refs):
        if expand != 1:
            (x_ref, w_e_ref, b_e_ref, w_d_ref, b_d_ref, w_p_ref, b_p_ref,
             o_ref, xe_ref) = refs
        else:
            (x_ref, w_d_ref, b_d_ref, w_p_ref, b_p_ref, o_ref, xe_ref) = refs

        ht = pl.program_id(1)

        # ---- 0. zero the 8-wide, sublane-aligned column pad strips of the scratch ----
        xe_ref[:, 0:L, :] = jnp.zeros((XR, L, mid), jnp.float32)
        xe_ref[:, L + W:Wp_alloc, :] = jnp.zeros((XR, Wp_alloc - (L + W), mid),
                                                 jnp.float32)

        # ---- 1. expansion 1x1 conv (+BN+ReLU6) on ONE contiguous input slab -----------
        # row0: first original-image row of this tile's halo'd window.
        row0 = ht * (TH * sh) - pad
        rstart = jnp.clip(row0, 0, H - n_slab)           # clamped slab origin (in-image)
        slab = x_ref[pl.ds(rstart, n_slab)]              # (n_slab, W, C), VMEM-resident
        xm = slab.reshape(n_slab * W, C)
        if expand != 1:
            z = jnp.dot(xm.astype(MXU_DTYPE), w_e_ref[...],
                        preferred_element_type=jnp.float32)
            z = jnp.clip(z + b_e_ref[...], 0.0, 6.0)
        else:
            z = xm.astype(jnp.float32)
        # Place the slab at its window position (offset differs from `pad` only on edge
        # tiles, where the clamp shifted the slab).  Image columns start at L (aligned).
        off = pad + rstart - row0
        xe_ref[pl.ds(off, n_slab), L:L + W, :] = z.reshape(n_slab, W, mid)

        # ---- 2. zero the out-of-image halo rows (edge tiles only) ---------------------
        @pl.when(ht == 0)
        def _():
            xe_ref[pad:2 * pad, :, :] = jnp.zeros((pad, Wp_alloc, mid), jnp.float32)

        if bot > 0:
            @pl.when(ht == pl.num_programs(1) - 1)
            def _():
                xe_ref[pad + TH_in - bot:pad + TH_in, :, :] = jnp.zeros(
                    (bot, Wp_alloc, mid), jnp.float32)

        # ---- 3. KxK depthwise conv (stride sh, sw) + BN + ReLU6 -----------------------
        wd = w_d_ref[...].astype(jnp.float32)            # (K*K, mid), loaded once

        def add_tap(acc, patch, tap):
            term = patch * wd[tap:tap + 1, :]
            return term if acc is None else acc + term

        acc = None
        if sw == 1:
            for kh in range(K):
                r0 = pad + kh
                for kw in range(K):
                    c0 = col0 + kw
                    patch = xe_ref[r0:r0 + (TH - 1) * sh + 1, c0:c0 + Wo, :]
                    if sh != 1:
                        patch = patch[::sh]
                    acc = add_tap(acc, patch, kh * K + kw)
        elif sw == 2:
            # De-interleave each row band into even/odd column planes ONCE, so every tap
            # reads a contiguous slice instead of a sublane-strided one.
            span_c = (K - 1) + (Wo - 1) * sw + 1
            for kh in range(K):
                r0 = pad + kh
                band = xe_ref[r0:r0 + (TH - 1) * sh + 1, col0:col0 + span_c, :]
                if sh != 1:
                    band = band[::sh]
                planes = (band[:, 0::2, :], band[:, 1::2, :])
                for kw in range(K):
                    patch = planes[kw % 2][:, kw // 2:kw // 2 + Wo, :]
                    acc = add_tap(acc, patch, kh * K + kw)
        else:   # generic stride fallback (unused by MixedMobileConvs)
            for kh in range(K):
                r0 = pad + kh
                band = xe_ref[r0:r0 + (TH - 1) * sh + 1, :, :]
                if sh != 1:
                    band = band[::sh]
                for kw in range(K):
                    c0 = col0 + kw
                    patch = band[:, c0:c0 + (Wo - 1) * sw + 1:sw, :]
                    acc = add_tap(acc, patch, kh * K + kw)

        y = jnp.clip(acc + b_d_ref[...], 0.0, 6.0)       # (TH, Wo, mid)

        # ---- 4. projection 1x1 conv + BN (+ residual) ---------------------------------
        p = jnp.dot(y.reshape(TH * Wo, mid).astype(MXU_DTYPE), w_p_ref[...],
                    preferred_element_type=jnp.float32)
        p = p + b_p_ref[...]
        if add_residual:                                  # stride (1,1): Wo == W, cout == C
            h0 = pl.multiple_of(ht * TH, TH)
            p = p + x_ref[pl.ds(h0, TH)].astype(jnp.float32).reshape(TH * Wo, C)
        # TODO(synk): for real model widths, pad cout/mid to 128 lanes (or keep channels
        # >=128) for lane-dense stores; the (TH, Wo*cout) lane-merge reshape was not used
        # here because Mosaic does not reliably lower last-two-dim merges at these sizes.
        o_ref[...] = p.reshape(TH, Wo, cout).astype(o_ref.dtype)

    return kernel


def mb_inverted_conv_fused(x_nhwc, fp, ksize, expand, stride, add_residual):
    """One fused MBInvertedConvLayer forward on an NHWC activation."""
    N, H, W, C = x_nhwc.shape
    K = ksize
    pad = K // 2
    sh, sw = stride
    mid = fp["w_dw"].shape[-1]
    cout = fp["w_pw"].shape[-1]
    Ho = (H + 2 * pad - K) // sh + 1
    Wo = (W + 2 * pad - K) // sw + 1
    if add_residual:
        assert (sh, sw) == (1, 1) and cout == C, "residual needs stride (1,1) and cin == cout"

    L = LEFT
    Wp_alloc = ((L + W + pad + 7) // 8) * 8          # image columns live at [L, L+W)

    TH = _pick_row_tile(Ho, H, sh, K, mid, Wp_alloc)  # output rows per grid step
    HT = Ho // TH
    assert TH * HT == Ho
    assert TH * sh >= pad                             # only first/last tile touch the halo
    TH_in = (TH - 1) * sh + K                         # window rows (incl. halo) per tile
    if HT > 1:
        assert TH_in <= H
    n_slab = min(TH_in, H)                            # in-image rows read per tile
    bot = max(0, (Ho - 1) * sh + K - pad - H)         # below-image rows of the LAST tile
    XR = TH_in + 2 * pad

    kernel = _make_fused_kernel(H=H, W=W, C=C, mid=mid, cout=cout, K=K, sh=sh, sw=sw,
                                TH=TH, TH_in=TH_in, n_slab=n_slab, bot=bot,
                                Wp_alloc=Wp_alloc, expand=expand,
                                add_residual=add_residual)

    inputs = [x_nhwc]
    in_specs = [pl.BlockSpec((None, H, W, C), lambda n, ht: (n, 0, 0, 0))]
    if expand != 1:
        inputs += [fp["w_exp"], fp["b_exp"].reshape(1, mid)]
        in_specs += [pl.BlockSpec((C, mid), lambda n, ht: (0, 0)),
                     pl.BlockSpec((1, mid), lambda n, ht: (0, 0))]
    inputs += [fp["w_dw"], fp["b_dw"].reshape(1, mid),
               fp["w_pw"], fp["b_pw"].reshape(1, cout)]
    in_specs += [pl.BlockSpec((K * K, mid), lambda n, ht: (0, 0)),
                 pl.BlockSpec((1, mid), lambda n, ht: (0, 0)),
                 pl.BlockSpec((mid, cout), lambda n, ht: (0, 0)),
                 pl.BlockSpec((1, cout), lambda n, ht: (0, 0))]

    return pl.pallas_call(
        kernel,
        out_shape=jax.ShapeDtypeStruct((N, Ho, Wo, cout), x_nhwc.dtype),
        grid=(N, HT),                                 # batch first: megacore splits on N
        in_specs=in_specs,
        out_specs=pl.BlockSpec((None, TH, Wo, cout), lambda n, ht: (n, ht, 0, 0)),
        scratch_shapes=[pltpu.VMEM((XR, Wp_alloc, mid), jnp.float32)],  # expanded window
        compiler_params=pltpu.CompilerParams(
            dimension_semantics=("parallel", "parallel"),
            vmem_limit_bytes=48 * 1024 * 1024),       # <= ~48 MiB: safe on v7x's 64 MiB VMEM
    )(*inputs)


# ---------------------------------------------------------------------------
# Parameter setup (mirrors MBInvertedConvLayer.__init__ shapes) + BN folding
# ---------------------------------------------------------------------------
def _fold_bn(gamma, beta, mean, var, eps=BN_EPS):
    scale = gamma / jnp.sqrt(var + eps)
    shift = beta - mean * scale
    return scale, shift


def _init_bn(key, c):
    k0, k1, k2, k3 = jax.random.split(key, 4)
    return dict(
        gamma=1.0 + 0.1 * jax.random.normal(k0, (c,), jnp.float32),
        beta=0.05 * jax.random.normal(k1, (c,), jnp.float32),
        mean=0.1 * jax.random.normal(k2, (c,), jnp.float32),
        var=jnp.abs(1.0 + 0.1 * jax.random.normal(k3, (c,), jnp.float32)),
    )


def init_mb_params(key, cin, cout, ksize, expand):
    mid = cin * expand
    keys = jax.random.split(key, 6)
    p = {}
    if expand != 1:
        p["w_exp"] = 0.2 * jax.random.normal(keys[0], (cin, mid), jnp.float32)
        p["bn_exp"] = _init_bn(keys[1], mid)
    p["w_dw"] = 0.2 * jax.random.normal(keys[2], (ksize, ksize, mid), jnp.float32)
    p["bn_dw"] = _init_bn(keys[3], mid)
    p["w_pw"] = 0.2 * jax.random.normal(keys[4], (mid, cout), jnp.float32)
    p["bn_pw"] = _init_bn(keys[5], cout)
    return p


def init_mixed_mobile_convs(key, in_channels, out_channels):
    keys = jax.random.split(key, len(OP_CONFIGS))
    return [init_mb_params(keys[i], in_channels, out_channels, k, e)
            for i, (k, e) in enumerate(OP_CONFIGS)]


def fold_mb_params(p, expand):
    """One-time prep: fold BN scale into conv weights; bf16 MXU weights; (K*K,mid) dw."""
    fp = {}
    if expand != 1:
        s, b = _fold_bn(**p["bn_exp"])
        fp["w_exp"] = (p["w_exp"] * s[None, :]).astype(MXU_DTYPE)
        fp["b_exp"] = b
    s, b = _fold_bn(**p["bn_dw"])
    K = p["w_dw"].shape[0]
    mid = p["w_dw"].shape[-1]
    fp["w_dw"] = (p["w_dw"] * s[None, None, :]).reshape(K * K, mid)   # f32, row per tap
    fp["b_dw"] = b
    s, b = _fold_bn(**p["bn_pw"])
    fp["w_pw"] = (p["w_pw"] * s[None, :]).astype(MXU_DTYPE)
    fp["b_pw"] = b
    return fp


def prepare_mixed_mobile_convs(params_list):
    return [fold_mb_params(p, e) for p, (_, e) in zip(params_list, OP_CONFIGS)]


# ---------------------------------------------------------------------------
# Forward (mirrors MixedMobileConvs.forward)
# ---------------------------------------------------------------------------
def mixed_mobile_convs_forward(folded_list, active_op, x_nchw, stride):
    if active_op == len(OP_CONFIGS):           # Identity choice
        return x_nchw
    ksize, expand = OP_CONFIGS[active_op]
    fp = folded_list[active_op]
    stride = tuple(stride)
    add_residual = stride == (1, 1)            # module adds shortcut only when not downsampling

    # TODO(synk): these boundary NCHW<->NHWC transposes are a full extra HBM pass each;
    # keep the surrounding model NHWC (or fold them into the index_map) to remove them.
    x = jnp.transpose(x_nchw, (0, 2, 3, 1))    # NCHW -> NHWC
    y = mb_inverted_conv_fused(x, fp, ksize, expand, stride, add_residual)
    return jnp.transpose(y, (0, 3, 1, 2))      # NHWC -> NCHW


# ---------------------------------------------------------------------------
# Pure-JAX reference (unfolded params, f32) for validation
# ---------------------------------------------------------------------------
def ref_forward(params_list, active_op, x_nchw, stride):
    if active_op == len(OP_CONFIGS):
        return x_nchw
    ksize, expand = OP_CONFIGS[active_op]
    p = params_list[active_op]
    x = jnp.transpose(x_nchw, (0, 2, 3, 1)).astype(jnp.float32)
    shortcut = x
    y = x
    if expand != 1:
        s, b = _fold_bn(**p["bn_exp"])
        y = jnp.clip(jnp.einsum("nhwc,cd->nhwd", y, p["w_exp"]) * s + b, 0.0, 6.0)
    mid = p["w_dw"].shape[-1]
    pad = ksize // 2
    dw = p["w_dw"].reshape(ksize, ksize, 1, mid)
    y = lax.conv_general_dilated(
        y, dw, window_strides=tuple(stride), padding=[(pad, pad), (pad, pad)],
        dimension_numbers=("NHWC", "HWIO", "NHWC"), feature_group_count=mid)
    s, b = _fold_bn(**p["bn_dw"])
    y = jnp.clip(y * s + b, 0.0, 6.0)
    s, b = _fold_bn(**p["bn_pw"])
    y = jnp.einsum("nhwc,cd->nhwd", y, p["w_pw"]) * s + b
    if tuple(stride) == (1, 1):
        y = y + shortcut
    return jnp.transpose(y, (0, 3, 1, 2))


# ---------------------------------------------------------------------------
if __name__ == "__main__":
    key = jax.random.PRNGKey(0)
    k_params, k_x = jax.random.split(key)

    N, C, H, W = 2, 8, 16, 16              # NCHW input, as in PyTorch
    params = init_mixed_mobile_convs(k_params, in_channels=C, out_channels=C)
    folded = prepare_mixed_mobile_convs(params)
    x = jax.random.normal(k_x, (N, C, H, W), jnp.float32)

    checks = [
        (2, (1, 1)),   # k=3, expand=6 : expansion path + residual add
        (3, (1, 1)),   # k=5, expand=1 : no expansion conv, residual add
        (4, (2, 2)),   # k=5, expand=3 : downsample (stride 2), no residual
    ]
    for active_op, stride in checks:
        fwd = jax.jit(functools.partial(mixed_mobile_convs_forward, folded, active_op,
                                        stride=stride))
        out = fwd(x)
        jax.block_until_ready(out)
        ref = ref_forward(params, active_op, x, stride)
        assert out.shape == ref.shape, (out.shape, ref.shape)
        err = float(jnp.max(jnp.abs(out - ref)))
        scale = float(jnp.max(jnp.abs(ref)))
        # tolerance sized for bf16 MXU operands (f32 accumulation)
        assert err <= 4e-2 * scale + 5e-2, (active_op, stride, err, scale)

    # Identity choice (op index 6) returns the input unchanged.
    out_id = mixed_mobile_convs_forward(folded, len(OP_CONFIGS), x, (1, 1))
    assert jnp.array_equal(out_id, x)

    print("KERNEL_OK")
</pallas_src>

<mosaic_0001>
module attributes {stable_mosaic.version = 11 : i64} {
  func.func @kernel(%arg0: i32, %arg1: i32, %arg2: memref<1x16x16x8xf32, #tpu.memory_space<vmem>>, %arg3: memref<8x48xbf16, #tpu.memory_space<vmem>>, %arg4: memref<1x48xf32, #tpu.memory_space<vmem>>, %arg5: memref<9x48xf32, #tpu.memory_space<vmem>>, %arg6: memref<1x48xf32, #tpu.memory_space<vmem>>, %arg7: memref<48x8xbf16, #tpu.memory_space<vmem>>, %arg8: memref<1x8xf32, #tpu.memory_space<vmem>>, %arg9: memref<1x16x16x8xf32, #tpu.memory_space<vmem>>, %arg10: memref<20x32x48xf32, #tpu.memory_space<vmem>>) attributes {dimension_semantics = [#tpu.dimension_semantics<parallel>, #tpu.dimension_semantics<parallel>], iteration_bounds = array<i64: 2, 1>, scalar_prefetch = 0 : i64, scratch_operands = 1 : i64, tpu.core_type = #tpu.core_type<tc>, window_params = [{transform_indices = @transform_0, window_bounds = array<i64: 1, 16, 16, 8>}, {pipeline_mode = #tpu.pipeline_mode<synchronous>, transform_indices = @transform_1, window_bounds = array<i64: 8, 48>}, {pipeline_mode = #tpu.pipeline_mode<synchronous>, transform_indices = @transform_2, window_bounds = array<i64: 1, 48>}, {pipeline_mode = #tpu.pipeline_mode<synchronous>, transform_indices = @transform_3, window_bounds = array<i64: 9, 48>}, {pipeline_mode = #tpu.pipeline_mode<synchronous>, transform_indices = @transform_4, window_bounds = array<i64: 1, 48>}, {pipeline_mode = #tpu.pipeline_mode<synchronous>, transform_indices = @transform_5, window_bounds = array<i64: 48, 8>}, {pipeline_mode = #tpu.pipeline_mode<synchronous>, transform_indices = @transform_6, window_bounds = array<i64: 1, 8>}, {transform_indices = @transform_7, window_bounds = array<i64: 1, 16, 16, 8>}]} {
    %cst = arith.constant 0.000000e+00 : f32
    %0 = vector.broadcast %cst : f32 to vector<20x8x48xf32>
    %c0 = arith.constant 0 : index
    %c0_0 = arith.constant 0 : index
    %c0_1 = arith.constant 0 : index
    %1 = vector.load %arg10[%c0, %c0_0, %c0_1] : memref<20x32x48xf32, #tpu.memory_space<vmem>>, vector<20x8x48xf32>
    tpu.vector_store %arg10[%c0, %c0_0, %c0_1], %0 {strides = array<i32>} : memref<20x32x48xf32, #tpu.memory_space<vmem>>, vector<20x8x48xf32>,
    %cst_2 = arith.constant 0.000000e+00 : f32
    %2 = vector.broadcast %cst_2 : f32 to vector<20x8x48xf32>
    %c0_3 = arith.constant 0 : index
    %c24 = arith.constant 24 : index
    %c0_4 = arith.constant 0 : index
    %3 = vector.load %arg10[%c0_3, %c24, %c0_4] : memref<20x32x48xf32, #tpu.memory_space<vmem>>, vector<20x8x48xf32>
    tpu.vector_store %arg10[%c0_3, %c24, %c0_4], %2 {strides = array<i32>} : memref<20x32x48xf32, #tpu.memory_space<vmem>>, vector<20x8x48xf32>,
    %c16_i32 = arith.constant 16 : i32
    %4 = arith.muli %arg1, %c16_i32 : i32
    %c1_i32 = arith.constant 1 : i32
    %5 = arith.subi %4, %c1_i32 : i32
    %c0_i32 = arith.constant 0 : i32
    %c0_i32_5 = arith.constant 0 : i32
    %6 = arith.maxsi %c0_i32, %5 : i32
    %7 = arith.minsi %c0_i32_5, %6 : i32
    %c0_6 = arith.constant 0 : index
    %8 = arith.index_cast %7 : i32 to index
    %c0_7 = arith.constant 0 : index
    %c0_8 = arith.constant 0 : index
    %9 = vector.load %arg2[%c0_6, %8, %c0_7, %c0_8] : memref<1x16x16x8xf32, #tpu.memory_space<vmem>>, vector<1x16x16x8xf32>
    %10 = vector.shape_cast %9 : vector<1x16x16x8xf32> to vector<16x16x8xf32>
    %11 = vector.shape_cast %10 : vector<16x16x8xf32> to vector<256x8xf32>
    %12 = arith.truncf %11 : vector<256x8xf32> to vector<256x8xbf16>
    %c0_9 = arith.constant 0 : index
    %c0_10 = arith.constant 0 : index
    %13 = vector.load %arg3[%c0_9, %c0_10] : memref<8x48xbf16, #tpu.memory_space<vmem>>, vector<8x48xbf16>
    %cst_11 = arith.constant dense<0.000000e+00> : vector<256x48xf32>
    %14 = tpu.matmul %12, %13, %cst_11 {dimension_numbers = #tpu.dot_dimension_numbers<[1], [0], [0], [1], [0, 0, 1, 1], [], []>} : vector<256x8xbf16>, vector<8x48xbf16>, vector<256x48xf32> -> vector<256x48xf32>
    %c0_12 = arith.constant 0 : index
    %c0_13 = arith.constant 0 : index
    %15 = vector.load %arg4[%c0_12, %c0_13] : memref<1x48xf32, #tpu.memory_space<vmem>>, vector<1x48xf32>
    %16 = vector.broadcast %15 : vector<1x48xf32> to vector<256x48xf32>
    %17 = arith.addf %14, %16 : vector<256x48xf32>
    %cst_14 = arith.constant 0.000000e+00 : f32
    %cst_15 = arith.constant 6.000000e+00 : f32
    %18 = vector.broadcast %cst_14 : f32 to vector<256x48xf32>
    %19 = arith.maximumf %18, %17 : vector<256x48xf32>
    %20 = vector.broadcast %cst_15 : f32 to vector<256x48xf32>
    %21 = arith.minimumf %20, %19 : vector<256x48xf32>
    %c1_i32_16 = arith.constant 1 : i32
    %22 = arith.addi %c1_i32_16, %7 : i32
    %23 = arith.subi %22, %5 : i32
    %24 = vector.shape_cast %21 : vector<256x48xf32> to vector<16x16x48xf32>
    %25 = arith.index_cast %23 : i32 to index
    %c8 = arith.constant 8 : index
    %c0_17 = arith.constant 0 : index
    %26 = vector.load %arg10[%25, %c8, %c0_17] : memref<20x32x48xf32, #tpu.memory_space<vmem>>, vector<16x16x48xf32>
    tpu.vector_store %arg10[%25, %c8, %c0_17], %24 {strides = array<i32>} : memref<20x32x48xf32, #tpu.memory_space<vmem>>, vector<16x16x48xf32>,
    %c0_i32_18 = arith.constant 0 : i32
    %27 = arith.cmpi eq, %arg1, %c0_i32_18 : i32
    %28 = arith.extui %27 : i1 to i32
    %c0_i32_19 = arith.constant 0 : i32
    %29 = arith.cmpi ne, %28, %c0_i32_19 : i32
    scf.if %29 {
      %cst_63 = arith.constant 0.000000e+00 : f32
      %113 = vector.broadcast %cst_63 : f32 to vector<1x32x48xf32>
      %c1_64 = arith.constant 1 : index
      %c0_65 = arith.constant 0 : index
      %c0_66 = arith.constant 0 : index
      %114 = vector.load %arg10[%c1_64, %c0_65, %c0_66] : memref<20x32x48xf32, #tpu.memory_space<vmem>>, vector<1x32x48xf32>
      tpu.vector_store %arg10[%c1_64, %c0_65, %c0_66], %113 {strides = array<i32>} : memref<20x32x48xf32, #tpu.memory_space<vmem>>, vector<1x32x48xf32>,
    } else {
    }
    %c0_i32_20 = arith.constant 0 : i32
    %30 = arith.cmpi eq, %arg1, %c0_i32_20 : i32
    %31 = arith.extui %30 : i1 to i32
    %c0_i32_21 = arith.constant 0 : i32
    %32 = arith.cmpi ne, %31, %c0_i32_21 : i32
    scf.if %32 {
      %cst_63 = arith.constant 0.000000e+00 : f32
      %113 = vector.broadcast %cst_63 : f32 to vector<1x32x48xf32>
      %c18 = arith.constant 18 : index
      %c0_64 = arith.constant 0 : index
      %c0_65 = arith.constant 0 : index
      %114 = vector.load %arg10[%c18, %c0_64, %c0_65] : memref<20x32x48xf32, #tpu.memory_space<vmem>>, vector<1x32x48xf32>
      tpu.vector_store %arg10[%c18, %c0_64, %c0_65], %113 {strides = array<i32>} : memref<20x32x48xf32, #tpu.memory_space<vmem>>, vector<1x32x48xf32>,
    } else {
    }
    %c0_22 = arith.constant 0 : index
    %c0_23 = arith.constant 0 : index
    %33 = vector.load %arg5[%c0_22, %c0_23] : memref<9x48xf32, #tpu.memory_space<vmem>>, vector<9x48xf32>
    %c1 = arith.constant 1 : index
    %c7 = arith.constant 7 : index
    %c0_24 = arith.constant 0 : index
    %34 = vector.load %arg10[%c1, %c7, %c0_24] : memref<20x32x48xf32, #tpu.memory_space<vmem>>, vector<16x16x48xf32>
    %35 = vector.extract_strided_slice %33 {offsets = [0, 0], sizes = [1, 48], strides = [1, 1]} : vector<9x48xf32> to vector<1x48xf32>
    %36 = vector.shape_cast %35 : vector<1x48xf32> to vector<1x1x48xf32>
    %37 = vector.broadcast %36 : vector<1x1x48xf32> to vector<16x16x48xf32>
    %38 = arith.mulf %34, %37 : vector<16x16x48xf32>
    %c1_25 = arith.constant 1 : index
    %c8_26 = arith.constant 8 : index
    %c0_27 = arith.constant 0 : index
    %39 = vector.load %arg10[%c1_25, %c8_26, %c0_27] : memref<20x32x48xf32, #tpu.memory_space<vmem>>, vector<16x16x48xf32>
    %40 = vector.extract_strided_slice %33 {offsets = [1, 0], sizes = [1, 48], strides = [1, 1]} : vector<9x48xf32> to vector<1x48xf32>
    %41 = vector.shape_cast %40 : vector<1x48xf32> to vector<1x1x48xf32>
    %42 = vector.broadcast %41 : vector<1x1x48xf32> to vector<16x16x48xf32>
    %43 = arith.mulf %39, %42 : vector<16x16x48xf32>
    %44 = arith.addf %38, %43 : vector<16x16x48xf32>
    %c1_28 = arith.constant 1 : index
    %c9 = arith.constant 9 : index
    %c0_29 = arith.constant 0 : index
    %45 = vector.load %arg10[%c1_28, %c9, %c0_29] : memref<20x32x48xf32, #tpu.memory_space<vmem>>, vector<16x16x48xf32>
    %46 = vector.extract_strided_slice %33 {offsets = [2, 0], sizes = [1, 48], strides = [1, 1]} : vector<9x48xf32> to vector<1x48xf32>
    %47 = vector.shape_cast %46 : vector<1x48xf32> to vector<1x1x48xf32>
    %48 = vector.broadcast %47 : vector<1x1x48xf32> to vector<16x16x48xf32>
    %49 = arith.mulf %45, %48 : vector<16x16x48xf32>
    %50 = arith.addf %44, %49 : vector<16x16x48xf32>
    %c2 = arith.constant 2 : index
    %c7_30 = arith.constant 7 : index
    %c0_31 = arith.constant 0 : index
    %51 = vector.load %arg10[%c2, %c7_30, %c0_31] : memref<20x32x48xf32, #tpu.memory_space<vmem>>, vector<16x16x48xf32>
    %52 = vector.extract_strided_slice %33 {offsets = [3, 0], sizes = [1, 48], strides = [1, 1]} : vector<9x48xf32> to vector<1x48xf32>
    %53 = vector.shape_cast %52 : vector<1x48xf32> to vector<1x1x48xf32>
    %54 = vector.broadcast %53 : vector<1x1x48xf32> to vector<16x16x48xf32>
    %55 = arith.mulf %51, %54 : vector<16x16x48xf32>
    %56 = arith.addf %50, %55 : vector<16x16x48xf32>
    %c2_32 = arith.constant 2 : index
    %c8_33 = arith.constant 8 : index
    %c0_34 = arith.constant 0 : index
    %57 = vector.load %arg10[%c2_32, %c8_33, %c0_34] : memref<20x32x48xf32, #tpu.memory_space<vmem>>, vector<16x16x48xf32>
    %58 = vector.extract_strided_slice %33 {offsets = [4, 0], sizes = [1, 48], strides = [1, 1]} : vector<9x48xf32> to vector<1x48xf32>
    %59 = vector.shape_cast %58 : vector<1x48xf32> to vector<1x1x48xf32>
    %60 = vector.broadcast %59 : vector<1x1x48xf32> to vector<16x16x48xf32>
    %61 = arith.mulf %57, %60 : vector<16x16x48xf32>
    %62 = arith.addf %56, %61 : vector<16x16x48xf32>
    %c2_35 = arith.constant 2 : index
    %c9_36 = arith.constant 9 : index
    %c0_37 = arith.constant 0 : index
    %63 = vector.load %arg10[%c2_35, %c9_36, %c0_37] : memref<20x32x48xf32, #tpu.memory_space<vmem>>, vector<16x16x48xf32>
    %64 = vector.extract_strided_slice %33 {offsets = [5, 0], sizes = [1, 48], strides = [1, 1]} : vector<9x48xf32> to vector<1x48xf32>
    %65 = vector.shape_cast %64 : vector<1x48xf32> to vector<1x1x48xf32>
    %66 = vector.broadcast %65 : vector<1x1x48xf32> to vector<16x16x48xf32>
    %67 = arith.mulf %63, %66 : vector<16x16x48xf32>
    %68 = arith.addf %62, %67 : vector<16x16x48xf32>
    %c3 = arith.constant 3 : index
    %c7_38 = arith.constant 7 : index
    %c0_39 = arith.constant 0 : index
    %69 = vector.load %arg10[%c3, %c7_38, %c0_39] : memref<20x32x48xf32, #tpu.memory_space<vmem>>, vector<16x16x48xf32>
    %70 = vector.extract_strided_slice %33 {offsets = [6, 0], sizes = [1, 48], strides = [1, 1]} : vector<9x48xf32> to vector<1x48xf32>
    %71 = vector.shape_cast %70 : vector<1x48xf32> to vector<1x1x48xf32>
    %72 = vector.broadcast %71 : vector<1x1x48xf32> to vector<16x16x48xf32>
    %73 = arith.mulf %69, %72 : vector<16x16x48xf32>
    %74 = arith.addf %68, %73 : vector<16x16x48xf32>
    %c3_40 = arith.constant 3 : index
    %c8_41 = arith.constant 8 : index
    %c0_42 = arith.constant 0 : index
    %75 = vector.load %arg10[%c3_40, %c8_41, %c0_42] : memref<20x32x48xf32, #tpu.memory_space<vmem>>, vector<16x16x48xf32>
    %76 = vector.extract_strided_slice %33 {offsets = [7, 0], sizes = [1, 48], strides = [1, 1]} : vector<9x48xf32> to vector<1x48xf32>
    %77 = vector.shape_cast %76 : vector<1x48xf32> to vector<1x1x48xf32>
    %78 = vector.broadcast %77 : vector<1x1x48xf32> to vector<16x16x48xf32>
    %79 = arith.mulf %75, %78 : vector<16x16x48xf32>
    %80 = arith.addf %74, %79 : vector<16x16x48xf32>
    %c3_43 = arith.constant 3 : index
    %c9_44 = arith.constant 9 : index
    %c0_45 = arith.constant 0 : index
    %81 = vector.load %arg10[%c3_43, %c9_44, %c0_45] : memref<20x32x48xf32, #tpu.memory_space<vmem>>, vector<16x16x48xf32>
    %82 = vector.extract_strided_slice %33 {offsets = [8, 0], sizes = [1, 48], strides = [1, 1]} : vector<9x48xf32> to vector<1x48xf32>
    %83 = vector.shape_cast %82 : vector<1x48xf32> to vector<1x1x48xf32>
    %84 = vector.broadcast %83 : vector<1x1x48xf32> to vector<16x16x48xf32>
    %85 = arith.mulf %81, %84 : vector<16x16x48xf32>
    %86 = arith.addf %80, %85 : vector<16x16x48xf32>
    %c0_46 = arith.constant 0 : index
    %c0_47 = arith.constant 0 : index
    %87 = vector.load %arg6[%c0_46, %c0_47] : memref<1x48xf32, #tpu.memory_space<vmem>>, vector<1x48xf32>
    %88 = vector.shape_cast %87 : vector<1x48xf32> to vector<1x1x48xf32>
    %89 = vector.broadcast %88 : vector<1x1x48xf32> to vector<16x16x48xf32>
    %90 = arith.addf %86, %89 : vector<16x16x48xf32>
    %cst_48 = arith.constant 0.000000e+00 : f32
    %cst_49 = arith.constant 6.000000e+00 : f32
    %91 = vector.broadcast %cst_48 : f32 to vector<16x16x48xf32>
    %92 = arith.maximumf %91, %90 : vector<16x16x48xf32>
    %93 = vector.broadcast %cst_49 : f32 to vector<16x16x48xf32>
    %94 = arith.minimumf %93, %92 : vector<16x16x48xf32>
    %95 = vector.shape_cast %94 : vector<16x16x48xf32> to vector<256x48xf32>
    %96 = arith.truncf %95 : vector<256x48xf32> to vector<256x48xbf16>
    %c0_50 = arith.constant 0 : index
    %c0_51 = arith.constant 0 : index
    %97 = vector.load %arg7[%c0_50, %c0_51] : memref<48x8xbf16, #tpu.memory_space<vmem>>, vector<48x8xbf16>
    %cst_52 = arith.constant dense<0.000000e+00> : vector<256x8xf32>
    %98 = tpu.matmul %96, %97, %cst_52 {dimension_numbers = #tpu.dot_dimension_numbers<[1], [0], [0], [1], [0, 0, 1, 1], [], []>} : vector<256x48xbf16>, vector<48x8xbf16>, vector<256x8xf32> -> vector<256x8xf32>
    %c0_53 = arith.constant 0 : index
    %c0_54 = arith.constant 0 : index
    %99 = vector.load %arg8[%c0_53, %c0_54] : memref<1x8xf32, #tpu.memory_space<vmem>>, vector<1x8xf32>
    %100 = vector.broadcast %99 : vector<1x8xf32> to vector<256x8xf32>
    %101 = arith.addf %98, %100 : vector<256x8xf32>
    %c16_i32_55 = arith.constant 16 : i32
    %102 = arith.muli %arg1, %c16_i32_55 : i32
    %103 = tpu.assume_multiple %102, 16 : i32
    %c0_56 = arith.constant 0 : index
    %104 = arith.index_cast %103 : i32 to index
    %c0_57 = arith.constant 0 : index
    %c0_58 = arith.constant 0 : index
    %105 = vector.load %arg2[%c0_56, %104, %c0_57, %c0_58] : memref<1x16x16x8xf32, #tpu.memory_space<vmem>>, vector<1x16x16x8xf32>
    %106 = vector.shape_cast %105 : vector<1x16x16x8xf32> to vector<16x16x8xf32>
    %107 = vector.shape_cast %106 : vector<16x16x8xf32> to vector<256x8xf32>
    %108 = arith.addf %101, %107 : vector<256x8xf32>
    %109 = vector.shape_cast %108 : vector<256x8xf32> to vector<16x16x8xf32>
    %c0_59 = arith.constant 0 : index
    %c0_60 = arith.constant 0 : index
    %c0_61 = arith.constant 0 : index
    %c0_62 = arith.constant 0 : index
    %110 = vector.load %arg9[%c0_59, %c0_60, %c0_61, %c0_62] : memref<1x16x16x8xf32, #tpu.memory_space<vmem>>, vector<1x16x16x8xf32>
    %111 = vector.shape_cast %110 : vector<1x16x16x8xf32> to vector<16x16x8xf32>
    %112 = vector.shape_cast %109 : vector<16x16x8xf32> to vector<1x16x16x8xf32>
    tpu.vector_store %arg9[%c0_59, %c0_60, %c0_61, %c0_62], %112 {strides = array<i32>} : memref<1x16x16x8xf32, #tpu.memory_space<vmem>>, vector<1x16x16x8xf32>,
    return
  }
  func.func @transform_0(%arg0: i32, %arg1: i32) -> (i32, i32, i32, i32) {
    %c0_i32 = arith.constant 0 : i32
    %c0_i32_0 = arith.constant 0 : i32
    %c0_i32_1 = arith.constant 0 : i32
    %c0_i32_2 = arith.constant 0 : i32
    return %arg0, %c0_i32, %c0_i32_0, %c0_i32_1 : i32, i32, i32, i32
  }
  func.func @transform_1(%arg0: i32, %arg1: i32) -> (i32, i32) {
    %c0_i32 = arith.constant 0 : i32
    %c0_i32_0 = arith.constant 0 : i32
    %c0_i32_1 = arith.constant 0 : i32
    return %c0_i32, %c0_i32_0 : i32, i32
  }
  func.func @transform_2(%arg0: i32, %arg1: i32) -> (i32, i32) {
    %c0_i32 = arith.constant 0 : i32
    %c0_i32_0 = arith.constant 0 : i32
    %c0_i32_1 = arith.constant 0 : i32
    return %c0_i32, %c0_i32_0 : i32, i32
  }
  func.func @transform_3(%arg0: i32, %arg1: i32) -> (i32, i32) {
    %c0_i32 = arith.constant 0 : i32
    %c0_i32_0 = arith.constant 0 : i32
    %c0_i32_1 = arith.constant 0 : i32
    return %c0_i32, %c0_i32_0 : i32, i32
  }
  func.func @transform_4(%arg0: i32, %arg1: i32) -> (i32, i32) {
    %c0_i32 = arith.constant 0 : i32
    %c0_i32_0 = arith.constant 0 : i32
    %c0_i32_1 = arith.constant 0 : i32
    return %c0_i32, %c0_i32_0 : i32, i32
  }
  func.func @transform_5(%arg0: i32, %arg1: i32) -> (i32, i32) {
    %c0_i32 = arith.constant 0 : i32
    %c0_i32_0 = arith.constant 0 : i32
    %c0_i32_1 = arith.constant 0 : i32
    return %c0_i32, %c0_i32_0 : i32, i32
  }
  func.func @transform_6(%arg0: i32, %arg1: i32) -> (i32, i32) {
    %c0_i32 = arith.constant 0 : i32
    %c0_i32_0 = arith.constant 0 : i32
    %c0_i32_1 = arith.constant 0 : i32
    return %c0_i32, %c0_i32_0 : i32, i32
  }
  func.func @transform_7(%arg0: i32, %arg1: i32) -> (i32, i32, i32, i32) {
    %c0_i32 = arith.constant 0 : i32
    %c0_i32_0 = arith.constant 0 : i32
    %c0_i32_1 = arith.constant 0 : i32
    return %arg0, %arg1, %c0_i32, %c0_i32_0 : i32, i32, i32, i32
  }
}

</mosaic_0001>

<llo_original>
// kernel: mixed_mobile_convs_forward.1
$region0: #{mixed_mobile_convs_forward.1}
  #allocation0 [shape = 'u32[]', space=smem, size = 0x4, offset = 0x4, fixed_abs, tag = 'smem constant byte address 0x4 - core index']
  #allocation1 [shape = 'u32[144,128]{1,0:T(1,128)}', space=vmem, size = 0x12000, scoped, tag = 'internal scratch']
  #allocation2 [shape = 'f32[20,32,48]{2,1,0:T(8,128)}', space=vmem, size = 0x50000, scoped, tag = 'scratch operand']
  %s0 = inlined_call_operand.vmem [shape: f32[2,16,16,8], index: 0, kind: input, shape index: {}]
  %s1 = inlined_call_operand.vmem [shape: bf16[8,48], index: 1, kind: input, shape index: {}]
  %s2 = inlined_call_operand.vmem [shape: f32[1,48], index: 2, kind: input, shape index: {}]
  %s3 = inlined_call_operand.vmem [shape: f32[9,48], index: 3, kind: input, shape index: {}]
  %s4 = inlined_call_operand.vmem [shape: f32[1,48], index: 4, kind: input, shape index: {}]
  %s5 = inlined_call_operand.vmem [shape: bf16[48,8], index: 5, kind: input, shape index: {}]
  %s6 = inlined_call_operand.vmem [shape: f32[1,8], index: 6, kind: input, shape index: {}]
  %s7 = inlined_call_operand.vmem [shape: f32[2,16,16,8], index: 7, kind: output, shape index: {}]
  %s8 = sld [smem:[#allocation0]]
  $region65: #{mixed_mobile_convs_forward.1} parent=0
    _
  %s10 = ssub.s32 1, %s8
  %s11 = scalar_select 0, %s10, %s8
  loop: start=0, step=1, limit=4
  $region2: #{mixed_mobile_convs_forward.1} parent=0 // loop_pre_header
    _
  $region3: #{mixed_mobile_convs_forward.1} parent=0 // loop_header
    %s13 = sphi 0, %s17
    %p14 = scmp.ge.s32.totalorder %s13, 4
    %s20 = sphi 0, %s32
    %s21 = sphi 0, %s28
    %s22 = sphi 0, %s20
    %s23 = sphi 0, %s21
    %s24 = sphi 0, %s22
    %s25 = sphi 0, %s23
    %s35 = sphi 0, %s37
    %s38 = sphi 0, %s35
    %s39 = sphi 0, %s38
    %s55 = sphi 0, %s39
    %s59 = sphi 0, %s59
    %s61 = sphi 0, %s59
    %s62 = sphi 0, %s61
    %s76 = sphi 0, %s62
    %s80 = sphi 0, %s80
    %s82 = sphi 0, %s80
    %s83 = sphi 0, %s82
    %s97 = sphi 0, %s83
    %s101 = sphi 0, %s101
    %s103 = sphi 0, %s101
    %s104 = sphi 0, %s103
    %s118 = sphi 0, %s104
    %s122 = sphi 0, %s122
    %s124 = sphi 0, %s122
    %s125 = sphi 0, %s124
    %s139 = sphi 0, %s125
    %s143 = sphi 0, %s143
    %s145 = sphi 0, %s143
    %s146 = sphi 0, %s145
    %s160 = sphi 0, %s146
    %s164 = sphi 0, %s164
    %s166 = sphi 0, %s164
    %s167 = sphi 0, %s166
    %s181 = sphi 0, %s167
    %s189 = sphi 0, %s191
    %s192 = sphi 0, %s189
    %s193 = sphi 0, %s192
    %s209 = sphi 0, %s193
  $region4: #{mixed_mobile_convs_forward.1} parent=0 // loop_header_branch
    %16 = sbr.rel (%p14) target = $region8
  $region5: #{mixed_mobile_convs_forward.1} parent=0 // loop_body
    %s18 = ssub.s32 %s13, 1
    %s19 = ssub.s32 %s13, 2
    %s26 = sadd.s32 1, %s21
    %p27 = scmp.ge.s32.totalorder %s26, 1
    %s28 = scalar_select %p27, 0, %s26
    %s29 = sadd.s32 1, %s20
    %s30 = scalar_select %p27, %s29, %s20
    %p31 = scmp.ge.s32.totalorder %s30, 2
    %s32 = scalar_select %p31, 0, %s30
    %s33 = ssub.s32 %s20, %s32
    %p34 = scmp.eq.s32.totalorder %s33, 0
    %s36 = sadd.s32 %s35, 1
    %s37 = scalar_select %p34, %s35, %s36
    %p40 = pneg %p34
    %p41 = scmp.eq.s32.totalorder %s13, 1
    %p42 = por %p40, %p41
    %p43 = scmp.ne.s32.totalorder %s35, %s38
    %p44 = scmp.eq.s32.totalorder %s13, 0
    %p45 = por %p43, %p44
    %p46 = scmp.ne.s32.totalorder %s35, %s38
    %p47 = scmp.eq.s32.totalorder %s18, 1
    %p48 = por %p46, %p47
    %p49 = scmp.ne.s32.totalorder %s38, %s39
    %p50 = scmp.eq.s32.totalorder %s18, 0
    %p51 = por %p49, %p50
    %p52 = scmp.ne.s32.totalorder %s38, %s39
    %p53 = scmp.eq.s32.totalorder %s19, 1
    %p54 = por %p52, %p53
    %p56 = scmp.ne.s32.totalorder %s39, %s55
    %p57 = scmp.eq.s32.totalorder %s19, 0
    %p58 = por %p56, %p57
    %s60 = sadd.s32 %s59, 1
    %p63 = scmp.eq.s32.totalorder %s13, 1
    %p64 = scmp.ne.s32.totalorder %s59, %s61
    %p65 = scmp.eq.s32.totalorder %s13, 0
    %p66 = por %p64, %p65
    %p67 = scmp.ne.s32.totalorder %s59, %s61
    %p68 = scmp.eq.s32.totalorder %s18, 1
    %p69 = por %p67, %p68
    %p70 = scmp.ne.s32.totalorder %s61, %s62
    %p71 = scmp.eq.s32.totalorder %s18, 0
    %p72 = por %p70, %p71
    %p73 = scmp.ne.s32.totalorder %s61, %s62
    %p74 = scmp.eq.s32.totalorder %s19, 1
    %p75 = por %p73, %p74
    %p77 = scmp.ne.s32.totalorder %s62, %s76
    %p78 = scmp.eq.s32.totalorder %s19, 0
    %p79 = por %p77, %p78
    %s81 = sadd.s32 %s80, 1
    %p84 = scmp.eq.s32.totalorder %s13, 1
    %p85 = scmp.ne.s32.totalorder %s80, %s82
    %p86 = scmp.eq.s32.totalorder %s13, 0
    %p87 = por %p85, %p86
    %p88 = scmp.ne.s32.totalorder %s80, %s82
    %p89 = scmp.eq.s32.totalorder %s18, 1
    %p90 = por %p88, %p89
    %p91 = scmp.ne.s32.totalorder %s82, %s83
    %p92 = scmp.eq.s32.totalorder %s18, 0
    %p93 = por %p91, %p92
    %p94 = scmp.ne.s32.totalorder %s82, %s83
    %p95 = scmp.eq.s32.totalorder %s19, 1
    %p96 = por %p94, %p95
    %p98 = scmp.ne.s32.totalorder %s83, %s97
    %p99 = scmp.eq.s32.totalorder %s19, 0
    %p100 = por %p98, %p99
    %s102 = sadd.s32 %s101, 1
    %p105 = scmp.eq.s32.totalorder %s13, 1
    %p106 = scmp.ne.s32.totalorder %s101, %s103
    %p107 = scmp.eq.s32.totalorder %s13, 0
    %p108 = por %p106, %p107
    %p109 = scmp.ne.s32.totalorder %s101, %s103
    %p110 = scmp.eq.s32.totalorder %s18, 1
    %p111 = por %p109, %p110
    %p112 = scmp.ne.s32.totalorder %s103, %s104
    %p113 = scmp.eq.s32.totalorder %s18, 0
    %p114 = por %p112, %p113
    %p115 = scmp.ne.s32.totalorder %s103, %s104
    %p116 = scmp.eq.s32.totalorder %s19, 1
    %p117 = por %p115, %p116
    %p119 = scmp.ne.s32.totalorder %s104, %s118
    %p120 = scmp.eq.s32.totalorder %s19, 0
    %p121 = por %p119, %p120
    %s123 = sadd.s32 %s122, 1
    %p126 = scmp.eq.s32.totalorder %s13, 1
    %p127 = scmp.ne.s32.totalorder %s122, %s124
    %p128 = scmp.eq.s32.totalorder %s13, 0
    %p129 = por %p127, %p128
    %p130 = scmp.ne.s32.totalorder %s122, %s124
    %p131 = scmp.eq.s32.totalorder %s18, 1
    %p132 = por %p130, %p131
    %p133 = scmp.ne.s32.totalorder %s124, %s125
    %p134 = scmp.eq.s32.totalorder %s18, 0
    %p135 = por %p133, %p134
    %p136 = scmp.ne.s32.totalorder %s124, %s125
    %p137 = scmp.eq.s32.totalorder %s19, 1
    %p138 = por %p136, %p137
    %p140 = scmp.ne.s32.totalorder %s125, %s139
    %p141 = scmp.eq.s32.totalorder %s19, 0
    %p142 = por %p140, %p141
    %s144 = sadd.s32 %s143, 1
    %p147 = scmp.eq.s32.totalorder %s13, 1
    %p148 = scmp.ne.s32.totalorder %s143, %s145
    %p149 = scmp.eq.s32.totalorder %s13, 0
    %p150 = por %p148, %p149
    %p151 = scmp.ne.s32.totalorder %s143, %s145
    %p152 = scmp.eq.s32.totalorder %s18, 1
    %p153 = por %p151, %p152
    %p154 = scmp.ne.s32.totalorder %s145, %s146
    %p155 = scmp.eq.s32.totalorder %s18, 0
    %p156 = por %p154, %p155
    %p157 = scmp.ne.s32.totalorder %s145, %s146
    %p158 = scmp.eq.s32.totalorder %s19, 1
    %p159 = por %p157, %p158
    %p161 = scmp.ne.s32.totalorder %s146, %s160
    %p162 = scmp.eq.s32.totalorder %s19, 0
    %p163 = por %p161, %p162
    %s165 = sadd.s32 %s164, 1
    %p168 = scmp.eq.s32.totalorder %s13, 1
    %p169 = scmp.ne.s32.totalorder %s164, %s166
    %p170 = scmp.eq.s32.totalorder %s13, 0
    %p171 = por %p169, %p170
    %p172 = scmp.ne.s32.totalorder %s164, %s166
    %p173 = scmp.eq.s32.totalorder %s18, 1
    %p174 = por %p172, %p173
    %p175 = scmp.ne.s32.totalorder %s166, %s167
    %p176 = scmp.eq.s32.totalorder %s18, 0
    %p177 = por %p175, %p176
    %p178 = scmp.ne.s32.totalorder %s166, %s167
    %p179 = scmp.eq.s32.totalorder %s19, 1
    %p180 = por %p178, %p179
    %p182 = scmp.ne.s32.totalorder %s167, %s181
    %p183 = scmp.eq.s32.totalorder %s19, 0
    %p184 = por %p182, %p183
    %s185 = ssub.s32 %s20, %s32
    %s186 = ssub.s32 %s21, %s28
    %s187 = sor.u32 %s185, %s186
    %p188 = scmp.eq.s32.totalorder %s187, 0
    %s190 = sadd.s32 %s189, 1
    %s191 = scalar_select %p188, %s189, %s190
    %p194 = pneg %p188
    %p195 = scmp.eq.s32.totalorder %s13, 1
    %p196 = por %p194, %p195
    %p197 = scmp.ne.s32.totalorder %s189, %s192
    %p198 = scmp.eq.s32.totalorder %s13, 0
    %p199 = por %p197, %p198
    %p200 = scmp.ne.s32.totalorder %s189, %s192
    %p201 = scmp.eq.s32.totalorder %s18, 1
    %p202 = por %p200, %p201
    %p203 = scmp.ne.s32.totalorder %s192, %s193
    %p204 = scmp.eq.s32.totalorder %s18, 0
    %p205 = por %p203, %p204
    %p206 = scmp.ne.s32.totalorder %s192, %s193
    %p207 = scmp.eq.s32.totalorder %s19, 1
    %p208 = por %p206, %p207
    %p210 = scmp.ne.s32.totalorder %s193, %s209
    %p211 = scmp.eq.s32.totalorder %s19, 0
    %p212 = por %p210, %p211
    %p213 = scmp.le.s32.totalorder 1, %s13
    %p214 = scmp.lt.s32.totalorder %s13, 3
    %p215 = pnand %p213, %p214
    %p216 = pneg %p215
    // Predicated region
    $region9: #{mixed_mobile_convs_forward.1} parent=5 // pred_check
      _
    $region10: #{mixed_mobile_convs_forward.1} parent=5 // pred_check_branch
      %218 = sbr.rel (%p215) target = $region12
    $region11: #{mixed_mobile_convs_forward.1} parent=5 // pred_region
      %s219 = ssub.s32 %s13, 1
      // Predicated region
      $region13: #{mixed_mobile_convs_forward.1} parent=11 // pred_check
        %p220 = pneg %p72
      $region14: #{mixed_mobile_convs_forward.1} parent=11 // pred_check_branch
        %222 = sbr.rel (%p220) target = $region16
      $region15: #{mixed_mobile_convs_forward.1} parent=11 // pred_region
        _
      $region16: #{mixed_mobile_convs_forward.1} parent=11 // pred_fallthru
        _
      // Predicated region
      $region17: #{mixed_mobile_convs_forward.1} parent=11 // pred_check
        %p223 = pneg %p93
      $region18: #{mixed_mobile_convs_forward.1} parent=11 // pred_check_branch
        %225 = sbr.rel (%p223) target = $region20
      $region19: #{mixed_mobile_convs_forward.1} parent=11 // pred_region
        _
      $region20: #{mixed_mobile_convs_forward.1} parent=11 // pred_fallthru
        _
      // Predicated region
      $region21: #{mixed_mobile_convs_forward.1} parent=11 // pred_check
        %p226 = pneg %p114
      $region22: #{mixed_mobile_convs_forward.1} parent=11 // pred_check_branch
        %228 = sbr.rel (%p226) target = $region24
      $region23: #{mixed_mobile_convs_forward.1} parent=11 // pred_region
        _
      $region24: #{mixed_mobile_convs_forward.1} parent=11 // pred_fallthru
        _
      // Predicated region
      $region25: #{mixed_mobile_convs_forward.1} parent=11 // pred_check
        %p229 = pneg %p135
      $region26: #{mixed_mobile_convs_forward.1} parent=11 // pred_check_branch
        %231 = sbr.rel (%p229) target = $region28
      $region27: #{mixed_mobile_convs_forward.1} parent=11 // pred_region
        _
      $region28: #{mixed_mobile_convs_forward.1} parent=11 // pred_fallthru
        _
      // Predicated region
      $region29: #{mixed_mobile_convs_forward.1} parent=11 // pred_check
        %p232 = pneg %p156
      $region30: #{mixed_mobile_convs_forward.1} parent=11 // pred_check_branch
        %234 = sbr.rel (%p232) target = $region32
      $region31: #{mixed_mobile_convs_forward.1} parent=11 // pred_region
        _
      $region32: #{mixed_mobile_convs_forward.1} parent=11 // pred_fallthru
        _
      // Predicated region
      $region33: #{mixed_mobile_convs_forward.1} parent=11 // pred_check
        %p235 = pneg %p177
      $region34: #{mixed_mobile_convs_forward.1} parent=11 // pred_check_branch
        %237 = sbr.rel (%p235) target = $region36
      $region35: #{mixed_mobile_convs_forward.1} parent=11 // pred_region
        _
      $region36: #{mixed_mobile_convs_forward.1} parent=11 // pred_fallthru
        _
    $region12: #{mixed_mobile_convs_forward.1} parent=5 // pred_fallthru
      _
    %p238 = scmp.lt.s32.totalorder %s13, 2
    // Predicated region
    $region37: #{mixed_mobile_convs_forward.1} parent=5 // pred_check
      %p239 = pneg %p238
    $region38: #{mixed_mobile_convs_forward.1} parent=5 // pred_check_branch
      %241 = sbr.rel (%p239) target = $region40
    $region39: #{mixed_mobile_convs_forward.1} parent=5 // pred_region
      // Predicated region
      $region41: #{mixed_mobile_convs_forward.1} parent=39 // pred_check
        %p242 = pneg %p45
      $region42: #{mixed_mobile_convs_forward.1} parent=39 // pred_check_branch
        %244 = sbr.rel (%p242) target = $region44
      $region43: #{mixed_mobile_convs_forward.1} parent=39 // pred_region
        %p245 = scmp.lt.s32.totalorder %s20, 1
        %s246 = scalar_select %p245, %s20, 1
        %s247 = smul.addr %s246, 32
        %s248 = smul.addr %s247, 8
        %s249 = scalar_lea.vmem %s0, %s248
      $region44: #{mixed_mobile_convs_forward.1} parent=39 // pred_fallthru
        _
    $region40: #{mixed_mobile_convs_forward.1} parent=5 // pred_fallthru
      _
    %p250 = scmp.le.s32.totalorder 1, %s13
    %p251 = scmp.lt.s32.totalorder %s13, 3
    %p252 = pnand %p250, %p251
    %p253 = pneg %p252
    // Predicated region
    $region45: #{mixed_mobile_convs_forward.1} parent=5 // pred_check
      _
    $region46: #{mixed_mobile_convs_forward.1} parent=5 // pred_check_branch
      %255 = sbr.rel (%p252) target = $region48
    $region47: #{mixed_mobile_convs_forward.1} parent=5 // pred_region
      %s256 = ssub.s32 %s13, 1
      %p257 = scmp.lt.s32.totalorder %s22, 1
      %s258 = scalar_select %p257, %s22, 1
      %s259 = smul.addr %s258, 32
      %s260 = smul.addr %s259, 8
      %s261 = scalar_lea.vmem %s0, %s260
      %p262 = pneg %p51
      %p263 = pneg %p48
      %p264 = pneg %p72
      %p265 = pneg %p69
      %p266 = pneg %p93
      %p267 = pneg %p90
      %p268 = pneg %p114
      %p269 = pneg %p111
      %p270 = pneg %p135
      %p271 = pneg %p132
      %p272 = pneg %p156
      %p273 = pneg %p153
      %p274 = pneg %p177
      %p275 = pneg %p174
      %p276 = pneg %p205
      %p277 = pneg %p202
      %s278 = smul.u32 16, %s23
      %p279 = scmp.lt.s32.totalorder %s22, 1
      %s280 = scalar_select %p279, %s22, 1
      %p281 = scmp.lt.s32.totalorder %s278, 15
      %s282 = scalar_select %p281, %s278, 15
      %s283 = smul.addr %s282, 2
      %s284 = smul.addr %s280, 32
      %s285 = sadd.s32 %s283, %s284
      %s286 = smul.addr %s285, 8
      %s287 = scalar_lea.vmem %s7, %s286
      %p288 = scmp.lt.s32.totalorder %s22, 1
      %s289 = scalar_select %p288, %s22, 1
      %s290 = smul.addr %s289, 32
      %s291 = smul.addr %s290, 8
      %s292 = scalar_lea.vmem %s0, %s291
      %s293 = smul.u32 16, %s23
      %p294 = scmp.lt.s32.totalorder %s22, 1
      %s295 = scalar_select %p294, %s22, 1
      %p296 = scmp.lt.s32.totalorder %s293, 15
      %s297 = scalar_select %p296, %s293, 15
      %s298 = smul.addr %s297, 2
      %s299 = smul.addr %s295, 32
      %s300 = sadd.s32 %s298, %s299
      %s301 = smul.addr %s300, 8
      %s302 = scalar_lea.vmem %s7, %s301
      %s303 = smul.u32 16, %s23
      %vm305 = vcmask 392192
      %306 = vst.msk [vmem:[#allocation2] sm:$0xff] %vm305, 0.0
      %307 = vst.msk [vmem:[#allocation2 + $0x20] sm:$0xff] %vm305, 0.0
      %308 = vst.msk [vmem:[#allocation2 + $0x40] sm:$0xff] %vm305, 0.0
      %309 = vst.msk [vmem:[#allocation2 + $0x60] sm:$0xff] %vm305, 0.0
      %310 = vst.msk [vmem:[#allocation2 + $0x80] sm:$0xff] %vm305, 0.0
      %311 = vst.msk [vmem:[#allocation2 + $0xa0] sm:$0xff] %vm305, 0.0
      %312 = vst.msk [vmem:[#allocation2 + $0xc0] sm:$0xff] %vm305, 0.0
      %313 = vst.msk [vmem:[#allocation2 + $0xe0] sm:$0xff] %vm305, 0.0
      %314 = vst.msk [vmem:[#allocation2 + $0x100] sm:$0xff] %vm305, 0.0
      %315 = vst.msk [vmem:[#allocation2 + $0x120] sm:$0xff] %vm305, 0.0
      %316 = vst.msk [vmem:[#allocation2 + $0x140] sm:$0xff] %vm305, 0.0
      %317 = vst.msk [vmem:[#allocation2 + $0x160] sm:$0xff] %vm305, 0.0
      %318 = vst.msk [vmem:[#allocation2 + $0x180] sm:$0xff] %vm305, 0.0
      %319 = vst.msk [vmem:[#allocation2 + $0x1a0] sm:$0xff] %vm305, 0.0
      %320 = vst.msk [vmem:[#allocation2 + $0x1c0] sm:$0xff] %vm305, 0.0
      %321 = vst.msk [vmem:[#allocation2 + $0x1e0] sm:$0xff] %vm305, 0.0
      %322 = vst.msk [vmem:[#allocation2 + $0x200] sm:$0xff] %vm305, 0.0
      %323 = vst.msk [vmem:[#allocation2 + $0x220] sm:$0xff] %vm305, 0.0
      %324 = vst.msk [vmem:[#allocation2 + $0x240] sm:$0xff] %vm305, 0.0
      %325 = vst.msk [vmem:[#allocation2 + $0x260] sm:$0xff] %vm305, 0.0
      %326 = vst.msk [vmem:[#allocation2 + $0x18] sm:$0xff] %vm305, 0.0
      %327 = vst.msk [vmem:[#allocation2 + $0x38] sm:$0xff] %vm305, 0.0
      %328 = vst.msk [vmem:[#allocation2 + $0x58] sm:$0xff] %vm305, 0.0
      %329 = vst.msk [vmem:[#allocation2 + $0x78] sm:$0xff] %vm305, 0.0
      %330 = vst.msk [vmem:[#allocation2 + $0x98] sm:$0xff] %vm305, 0.0
      %331 = vst.msk [vmem:[#allocation2 + $0xb8] sm:$0xff] %vm305, 0.0
      %332 = vst.msk [vmem:[#allocation2 + $0xd8] sm:$0xff] %vm305, 0.0
      %333 = vst.msk [vmem:[#allocation2 + $0xf8] sm:$0xff] %vm305, 0.0
      %334 = vst.msk [vmem:[#allocation2 + $0x118] sm:$0xff] %vm305, 0.0
      %335 = vst.msk [vmem:[#allocation2 + $0x138] sm:$0xff] %vm305, 0.0
      %336 = vst.msk [vmem:[#allocation2 + $0x158] sm:$0xff] %vm305, 0.0
      %337 = vst.msk [vmem:[#allocation2 + $0x178] sm:$0xff] %vm305, 0.0
      %338 = vst.msk [vmem:[#allocation2 + $0x198] sm:$0xff] %vm305, 0.0
      %339 = vst.msk [vmem:[#allocation2 + $0x1b8] sm:$0xff] %vm305, 0.0
      %340 = vst.msk [vmem:[#allocation2 + $0x1d8] sm:$0xff] %vm305, 0.0
      %341 = vst.msk [vmem:[#allocation2 + $0x1f8] sm:$0xff] %vm305, 0.0
      %342 = vst.msk [vmem:[#allocation2 + $0x218] sm:$0xff] %vm305, 0.0
      %343 = vst.msk [vmem:[#allocation2 + $0x238] sm:$0xff] %vm305, 0.0
      %344 = vst.msk [vmem:[#allocation2 + $0x258] sm:$0xff] %vm305, 0.0
      %345 = vst.msk [vmem:[#allocation2 + $0x278] sm:$0xff] %vm305, 0.0
      %s346 = smul.u32 %s23, 16
      %s347 = ssub.s32 %s346, 1
      %p348 = scmp.gt.s32.totalorder %s347, 0
      %s349 = scalar_select %p348, %s347, 0
      %p350 = scmp.lt.s32.totalorder %s349, 0
      %s351 = scalar_select %p350, %s349, 0
      %s352 = smul.u32 %s351, 16
      %s353 = scalar_lea.vmem %s292, %s352
      %v354 = vld [vmem:[%s353] sm:$0xff]
      %v355 = vld [vmem:[%s353 + $0x8] sm:$0xff]
      %v356 = vld [vmem:[%s353 + $0x10] sm:$0xff]
      %v357 = vld [vmem:[%s353 + $0x18] sm:$0xff]
      %v358 = vld [vmem:[%s353 + $0x20] sm:$0xff]
      %v359 = vld [vmem:[%s353 + $0x28] sm:$0xff]
      %v360 = vld [vmem:[%s353 + $0x30] sm:$0xff]
      %v361 = vld [vmem:[%s353 + $0x38] sm:$0xff]
      %v362 = vld [vmem:[%s353 + $0x40] sm:$0xff]
      %v363 = vld [vmem:[%s353 + $0x48] sm:$0xff]
      %v364 = vld [vmem:[%s353 + $0x50] sm:$0xff]
      %v365 = vld [vmem:[%s353 + $0x58] sm:$0xff]
      %v366 = vld [vmem:[%s353 + $0x60] sm:$0xff]
      %v367 = vld [vmem:[%s353 + $0x68] sm:$0xff]
      %v368 = vld [vmem:[%s353 + $0x70] sm:$0xff]
      %v369 = vld [vmem:[%s353 + $0x78] sm:$0xff]
      %v370 = vld [vmem:[%s353 + $0x80] sm:$0xff]
      %v371 = vld [vmem:[%s353 + $0x88] sm:$0xff]
      %v372 = vld [vmem:[%s353 + $0x90] sm:$0xff]
      %v373 = vld [vmem:[%s353 + $0x98] sm:$0xff]
      %v374 = vld [vmem:[%s353 + $0xa0] sm:$0xff]
      %v375 = vld [vmem:[%s353 + $0xa8] sm:$0xff]
      %v376 = vld [vmem:[%s353 + $0xb0] sm:$0xff]
      %v377 = vld [vmem:[%s353 + $0xb8] sm:$0xff]
      %v378 = vld [vmem:[%s353 + $0xc0] sm:$0xff]
      %v379 = vld [vmem:[%s353 + $0xc8] sm:$0xff]
      %v380 = vld [vmem:[%s353 + $0xd0] sm:$0xff]
      %v381 = vld [vmem:[%s353 + $0xd8] sm:$0xff]
      %v382 = vld [vmem:[%s353 + $0xe0] sm:$0xff]
      %v383 = vld [vmem:[%s353 + $0xe8] sm:$0xff]
      %v384 = vld [vmem:[%s353 + $0xf0] sm:$0xff]
      %v385 = vld [vmem:[%s353 + $0xf8] sm:$0xff]
      %v386 = vpack.c.bf16 %v355, %v354
      %v387 = vpack.c.bf16 %v357, %v356
      %v388 = vpack.c.bf16 %v359, %v358
      %v389 = vpack.c.bf16 %v361, %v360
      %v390 = vpack.c.bf16 %v363, %v362
      %v391 = vpack.c.bf16 %v365, %v364
      %v392 = vpack.c.bf16 %v367, %v366
      %v393 = vpack.c.bf16 %v369, %v368
      %v394 = vpack.c.bf16 %v371, %v370
      %v395 = vpack.c.bf16 %v373, %v372
      %v396 = vpack.c.bf16 %v375, %v374
      %v397 = vpack.c.bf16 %v377, %v376
      %v398 = vpack.c.bf16 %v379, %v378
      %v399 = vpack.c.bf16 %v381, %v380
      %v400 = vpack.c.bf16 %v383, %v382
      %v401 = vpack.c.bf16 %v385, %v384
      %v402 = vld [vmem:[%s1] sm:$0xf]
      %v403 = vld [vmem:[%s2] sm:$0x1]
      %v405 = vlaneseq
      %v406 = vshrl.u32 %v405, 7
      %v407 = vsub.s32 0, %v406
      %v408 = vrot.slane %v403, %v407
      %vm410 = vcmask 64512
      %v412 = vsel %vm410, %v386, 0
      %v415 = vsel %vm410, %v387, 0
      %v418 = vsel %vm410, %v388, 0
      %v421 = vsel %vm410, %v389, 0
      %v424 = vsel %vm410, %v390, 0
      %v427 = vsel %vm410, %v391, 0
      %v430 = vsel %vm410, %v392, 0
      %v433 = vsel %vm410, %v393, 0
      %v436 = vsel %vm410, %v394, 0
      %v439 = vsel %vm410, %v395, 0
      %v442 = vsel %vm410, %v396, 0
      %v445 = vsel %vm410, %v397, 0
      %v448 = vsel %vm410, %v398, 0
      %v451 = vsel %vm410, %v399, 0
      %v454 = vsel %vm410, %v400, 0
      %v457 = vsel %vm410, %v401, 0
      %vm459 = vcmask 1043456
      %v461 = vsel %vm459, %v402, 0
      %463 = vmatprep.subr.bf16.mxu0 0
      %464 = vmatpush1.bf16.msra.mxu0 0
      %465 = vmatprep.subr.bf16.mxu0 0
      %466 = vmatpush1.bf16.msra.mxu0 0
      %467 = vmatprep.subr.bf16.mxu0 0
      %468 = vmatpush1.bf16.msra.mxu0 0
      %469 = vmatprep.subr.bf16.mxu0 0
      %470 = vmatpush1.bf16.msra.mxu0 0
      %471 = vmatprep.subr.bf16.mxu0 0
      %472 = vmatpush1.bf16.msra.mxu0 0
      %473 = vmatprep.subr.bf16.mxu0 0
      %474 = vmatpush1.bf16.msra.mxu0 0
      %475 = vmatprep.subr.bf16.mxu0 0
      %476 = vmatpush1.bf16.msra.mxu0 0
      %477 = vmatprep.subr.bf16.mxu0 0
      %478 = vmatpush1.bf16.msra.mxu0 %v461
      %479 = vmatprep.subr.bf16.mxu0 0
      %480 = vmatpush2.bf16.msra.mxu0 0
      %481 = vmatprep.subr.bf16.mxu0 0
      %482 = vmatpush2.bf16.msra.mxu0 0
      %483 = vmatprep.subr.bf16.mxu0 0
      %484 = vmatpush2.bf16.msra.mxu0 0
      %485 = vmatprep.subr.bf16.mxu0 0
      %486 = vmatpush2.bf16.msra.mxu0 0
      %487 = vmatprep.subr.bf16.mxu0 0
      %488 = vmatpush2.bf16.msra.mxu0 0
      %489 = vmatprep.subr.bf16.mxu0 0
      %490 = vmatpush2.bf16.msra.mxu0 0
      %491 = vmatprep.subr.bf16.mxu0 0
      %492 = vmatpush2.bf16.msra.mxu0 0
      %493 = vmatprep.subr.bf16.mxu0 0
      %494 = vmatpush2.bf16.msra.mxu0 0
      %495 = vmatprep.mubr.bf16.mxu0 0
      %496 = vmatmul.mubr.bf16.gmra.mxu0 %v412
      %v497 = vpop.f32.mrf.mxu0
      %v498 = vadd.f32 %v408, %v497
      %v499 = vpop.f32.mrf.mxu0
      %v500 = vpop.f32.mrf.mxu0
      %v501 = vadd.f32 %v408, %v500
      %v502 = vpop.f32.mrf.mxu0
      %503 = vmatprep.mubr.bf16.mxu0 0
      %504 = vmatmul.mubr.bf16.gmra.mxu0 %v415
      %v505 = vpop.f32.mrf.mxu0
      %v506 = vadd.f32 %v408, %v505
      %v507 = vpop.f32.mrf.mxu0
      %v508 = vpop.f32.mrf.mxu0
      %v509 = vadd.f32 %v408, %v508
      %v510 = vpop.f32.mrf.mxu0
      %511 = vmatprep.mubr.bf16.mxu0 0
      %512 = vmatmul.mubr.bf16.gmra.mxu0 %v418
      %v513 = vpop.f32.mrf.mxu0
      %v514 = vadd.f32 %v408, %v513
      %v515 = vpop.f32.mrf.mxu0
      %v516 = vpop.f32.mrf.mxu0
      %v517 = vadd.f32 %v408, %v516
      %v518 = vpop.f32.mrf.mxu0
      %519 = vmatprep.mubr.bf16.mxu0 0
      %520 = vmatmul.mubr.bf16.gmra.mxu0 %v421
      %v521 = vpop.f32.mrf.mxu0
      %v522 = vadd.f32 %v408, %v521
      %v523 = vpop.f32.mrf.mxu0
      %v524 = vpop.f32.mrf.mxu0
      %v525 = vadd.f32 %v408, %v524
      %v526 = vpop.f32.mrf.mxu0
      %527 = vmatprep.mubr.bf16.mxu0 0
      %528 = vmatmul.mubr.bf16.gmra.mxu0 %v424
      %v529 = vpop.f32.mrf.mxu0
      %v530 = vadd.f32 %v408, %v529
      %v531 = vpop.f32.mrf.mxu0
      %v532 = vpop.f32.mrf.mxu0
      %v533 = vadd.f32 %v408, %v532
      %v534 = vpop.f32.mrf.mxu0
      %535 = vmatprep.mubr.bf16.mxu0 0
      %536 = vmatmul.mubr.bf16.gmra.mxu0 %v427
      %v537 = vpop.f32.mrf.mxu0
      %v538 = vadd.f32 %v408, %v537
      %v539 = vpop.f32.mrf.mxu0
      %v540 = vpop.f32.mrf.mxu0
      %v541 = vadd.f32 %v408, %v540
      %v542 = vpop.f32.mrf.mxu0
      %543 = vmatprep.mubr.bf16.mxu0 0
      %544 = vmatmul.mubr.bf16.gmra.mxu0 %v430
      %v545 = vpop.f32.mrf.mxu0
      %v546 = vadd.f32 %v408, %v545
      %v547 = vpop.f32.mrf.mxu0
      %v548 = vpop.f32.mrf.mxu0
      %v549 = vadd.f32 %v408, %v548
      %v550 = vpop.f32.mrf.mxu0
      %551 = vmatprep.mubr.bf16.mxu0 0
      %552 = vmatmul.mubr.bf16.gmra.mxu0 %v433
      %v553 = vpop.f32.mrf.mxu0
      %v554 = vadd.f32 %v408, %v553
      %v555 = vpop.f32.mrf.mxu0
      %v556 = vpop.f32.mrf.mxu0
      %v557 = vadd.f32 %v408, %v556
      %v558 = vpop.f32.mrf.mxu0
      %559 = vmatprep.mubr.bf16.mxu0 0
      %560 = vmatmul.mubr.bf16.gmra.mxu0 %v436
      %v561 = vpop.f32.mrf.mxu0
      %v562 = vadd.f32 %v408, %v561
      %v563 = vpop.f32.mrf.mxu0
      %v564 = vpop.f32.mrf.mxu0
      %v565 = vadd.f32 %v408, %v564
      %v566 = vpop.f32.mrf.mxu0
      %567 = vmatprep.mubr.bf16.mxu0 0
      %568 = vmatmul.mubr.bf16.gmra.mxu0 %v439
      %v569 = vpop.f32.mrf.mxu0
      %v570 = vadd.f32 %v408, %v569
      %v571 = vpop.f32.mrf.mxu0
      %v572 = vpop.f32.mrf.mxu0
      %v573 = vadd.f32 %v408, %v572
      %v574 = vpop.f32.mrf.mxu0
      %575 = vmatprep.mubr.bf16.mxu0 0
      %576 = vmatmul.mubr.bf16.gmra.mxu0 %v442
      %v577 = vpop.f32.mrf.mxu0
      %v578 = vadd.f32 %v408, %v577
      %v579 = vpop.f32.mrf.mxu0
      %v580 = vpop.f32.mrf.mxu0
      %v581 = vadd.f32 %v408, %v580
      %v582 = vpop.f32.mrf.mxu0
      %583 = vmatprep.mubr.bf16.mxu0 0
      %584 = vmatmul.mubr.bf16.gmra.mxu0 %v445
      %v585 = vpop.f32.mrf.mxu0
      %v586 = vadd.f32 %v408, %v585
      %v587 = vpop.f32.mrf.mxu0
      %v588 = vpop.f32.mrf.mxu0
      %v589 = vadd.f32 %v408, %v588
      %v590 = vpop.f32.mrf.mxu0
      %591 = vmatprep.mubr.bf16.mxu0 0
      %592 = vmatmul.mubr.bf16.gmra.mxu0 %v448
      %v593 = vpop.f32.mrf.mxu0
      %v594 = vadd.f32 %v408, %v593
      %v595 = vpop.f32.mrf.mxu0
      %v596 = vpop.f32.mrf.mxu0
      %v597 = vadd.f32 %v408, %v596
      %v598 = vpop.f32.mrf.mxu0
      %599 = vmatprep.mubr.bf16.mxu0 0
      %600 = vmatmul.mubr.bf16.gmra.mxu0 %v451
      %v601 = vpop.f32.mrf.mxu0
      %v602 = vadd.f32 %v408, %v601
      %v603 = vpop.f32.mrf.mxu0
      %v604 = vpop.f32.mrf.mxu0
      %v605 = vadd.f32 %v408, %v604
      %v606 = vpop.f32.mrf.mxu0
      %607 = vmatprep.mubr.bf16.mxu0 0
      %608 = vmatmul.mubr.bf16.gmra.mxu0 %v454
      %v609 = vpop.f32.mrf.mxu0
      %v610 = vadd.f32 %v408, %v609
      %v611 = vpop.f32.mrf.mxu0
      %v612 = vpop.f32.mrf.mxu0
      %v613 = vadd.f32 %v408, %v612
      %v614 = vpop.f32.mrf.mxu0
      %615 = vmatprep.mubr.bf16.mxu0 0
      %616 = vmatmul.mubr.bf16.gmra.mxu0 %v457
      %v617 = vpop.f32.mrf.mxu0
      %v618 = vadd.f32 %v408, %v617
      %v619 = vpop.f32.mrf.mxu0
      %v620 = vpop.f32.mrf.mxu0
      %v621 = vadd.f32 %v408, %v620
      %v622 = vpop.f32.mrf.mxu0
      %623 = vdwg.mxu0
      %v624 = vmax.f32 %v498, 0.0
      %v625 = vmax.f32 %v501, 0.0
      %v626 = vmax.f32 %v506, 0.0
      %v627 = vmax.f32 %v509, 0.0
      %v628 = vmax.f32 %v514, 0.0
      %v629 = vmax.f32 %v517, 0.0
      %v630 = vmax.f32 %v522, 0.0
      %v631 = vmax.f32 %v525, 0.0
      %v632 = vmax.f32 %v530, 0.0
      %v633 = vmax.f32 %v533, 0.0
      %v634 = vmax.f32 %v538, 0.0
      %v635 = vmax.f32 %v541, 0.0
      %v636 = vmax.f32 %v546, 0.0
      %v637 = vmax.f32 %v549, 0.0
      %v638 = vmax.f32 %v554, 0.0
      %v639 = vmax.f32 %v557, 0.0
      %v640 = vmax.f32 %v562, 0.0
      %v641 = vmax.f32 %v565, 0.0
      %v642 = vmax.f32 %v570, 0.0
      %v643 = vmax.f32 %v573, 0.0
      %v644 = vmax.f32 %v578, 0.0
      %v645 = vmax.f32 %v581, 0.0
      %v646 = vmax.f32 %v586, 0.0
      %v647 = vmax.f32 %v589, 0.0
      %v648 = vmax.f32 %v594, 0.0
      %v649 = vmax.f32 %v597, 0.0
      %v650 = vmax.f32 %v602, 0.0
      %v651 = vmax.f32 %v605, 0.0
      %v652 = vmax.f32 %v610, 0.0
      %v653 = vmax.f32 %v613, 0.0
      %v654 = vmax.f32 %v618, 0.0
      %v655 = vmax.f32 %v621, 0.0
      %v656 = vmin.f32 %v624, 6.0
      %v657 = vmin.f32 %v625, 6.0
      %v658 = vmin.f32 %v626, 6.0
      %v659 = vmin.f32 %v627, 6.0
      %v660 = vmin.f32 %v628, 6.0
      %v661 = vmin.f32 %v629, 6.0
      %v662 = vmin.f32 %v630, 6.0
      %v663 = vmin.f32 %v631, 6.0
      %v664 = vmin.f32 %v632, 6.0
      %v665 = vmin.f32 %v633, 6.0
      %v666 = vmin.f32 %v634, 6.0
      %v667 = vmin.f32 %v635, 6.0
      %v668 = vmin.f32 %v636, 6.0
      %v669 = vmin.f32 %v637, 6.0
      %v670 = vmin.f32 %v638, 6.0
      %v671 = vmin.f32 %v639, 6.0
      %v672 = vmin.f32 %v640, 6.0
      %v673 = vmin.f32 %v641, 6.0
      %v674 = vmin.f32 %v642, 6.0
      %v675 = vmin.f32 %v643, 6.0
      %v676 = vmin.f32 %v644, 6.0
      %v677 = vmin.f32 %v645, 6.0
      %v678 = vmin.f32 %v646, 6.0
      %v679 = vmin.f32 %v647, 6.0
      %v680 = vmin.f32 %v648, 6.0
      %v681 = vmin.f32 %v649, 6.0
      %v682 = vmin.f32 %v650, 6.0
      %v683 = vmin.f32 %v651, 6.0
      %v684 = vmin.f32 %v652, 6.0
      %v685 = vmin.f32 %v653, 6.0
      %v686 = vmin.f32 %v654, 6.0
      %v687 = vmin.f32 %v655, 6.0
      %s688 = sadd.s32 %s351, 1
      %s689 = ssub.s32 %s688, %s347
      %s690 = smul.u32 %s689, 32
      %s691 = scalar_lea.vmem [#allocation2], %s690
      %692 = vst.msk [vmem:[%s691 + $0x8] sm:$0xff] %vm305, %v656
      %693 = vst.msk [vmem:[%s691 + $0x10] sm:$0xff] %vm305, %v657
      %694 = vst.msk [vmem:[%s691 + $0x28] sm:$0xff] %vm305, %v658
      %695 = vst.msk [vmem:[%s691 + $0x30] sm:$0xff] %vm305, %v659
      %696 = vst.msk [vmem:[%s691 + $0x48] sm:$0xff] %vm305, %v660
      %697 = vst.msk [vmem:[%s691 + $0x50] sm:$0xff] %vm305, %v661
      %698 = vst.msk [vmem:[%s691 + $0x68] sm:$0xff] %vm305, %v662
      %699 = vst.msk [vmem:[%s691 + $0x70] sm:$0xff] %vm305, %v663
      %700 = vst.msk [vmem:[%s691 + $0x88] sm:$0xff] %vm305, %v664
      %701 = vst.msk [vmem:[%s691 + $0x90] sm:$0xff] %vm305, %v665
      %702 = vst.msk [vmem:[%s691 + $0xa8] sm:$0xff] %vm305, %v666
      %703 = vst.msk [vmem:[%s691 + $0xb0] sm:$0xff] %vm305, %v667
      %704 = vst.msk [vmem:[%s691 + $0xc8] sm:$0xff] %vm305, %v668
      %705 = vst.msk [vmem:[%s691 + $0xd0] sm:$0xff] %vm305, %v669
      %706 = vst.msk [vmem:[%s691 + $0xe8] sm:$0xff] %vm305, %v670
      %707 = vst.msk [vmem:[%s691 + $0xf0] sm:$0xff] %vm305, %v671
      %708 = vst.msk [vmem:[%s691 + $0x108] sm:$0xff] %vm305, %v672
      %709 = vst.msk [vmem:[%s691 + $0x110] sm:$0xff] %vm305, %v673
      %710 = vst.msk [vmem:[%s691 + $0x128] sm:$0xff] %vm305, %v674
      %711 = vst.msk [vmem:[%s691 + $0x130] sm:$0xff] %vm305, %v675
      %712 = vst.msk [vmem:[%s691 + $0x148] sm:$0xff] %vm305, %v676
      %713 = vst.msk [vmem:[%s691 + $0x150] sm:$0xff] %vm305, %v677
      %714 = vst.msk [vmem:[%s691 + $0x168] sm:$0xff] %vm305, %v678
      %715 = vst.msk [vmem:[%s691 + $0x170] sm:$0xff] %vm305, %v679
      %716 = vst.msk [vmem:[%s691 + $0x188] sm:$0xff] %vm305, %v680
      %717 = vst.msk [vmem:[%s691 + $0x190] sm:$0xff] %vm305, %v681
      %718 = vst.msk [vmem:[%s691 + $0x1a8] sm:$0xff] %vm305, %v682
      %719 = vst.msk [vmem:[%s691 + $0x1b0] sm:$0xff] %vm305, %v683
      %720 = vst.msk [vmem:[%s691 + $0x1c8] sm:$0xff] %vm305, %v684
      %721 = vst.msk [vmem:[%s691 + $0x1d0] sm:$0xff] %vm305, %v685
      %722 = vst.msk [vmem:[%s691 + $0x1e8] sm:$0xff] %vm305, %v686
      %723 = vst.msk [vmem:[%s691 + $0x1f0] sm:$0xff] %vm305, %v687
      %p724 = scmp.eq.s32.totalorder %s23, 0
      // Predicated region
      $region49: #{mixed_mobile_convs_forward.1} parent=47 // pred_check
        %p725 = pneg %p724
      $region50: #{mixed_mobile_convs_forward.1} parent=47 // pred_check_branch
        %727 = sbr.rel (%p725) target = $region52
      $region51: #{mixed_mobile_convs_forward.1} parent=47 // pred_region
        %s728 = scalar_lea.vmem [#allocation2], 32
        %729 = vst.msk [vmem:[%s728] sm:$0xff] %vm305, 0.0
        %730 = vst.msk [vmem:[%s728 + $0x8] sm:$0xff] %vm305, 0.0
        %731 = vst.msk [vmem:[%s728 + $0x10] sm:$0xff] %vm305, 0.0
        %732 = vst.msk [vmem:[%s728 + $0x18] sm:$0xff] %vm305, 0.0
        %s733 = scalar_lea.vmem [#allocation2], 576
        %734 = vst.msk [vmem:[%s733] sm:$0xff] %vm305, 0.0
        %735 = vst.msk [vmem:[%s733 + $0x8] sm:$0xff] %vm305, 0.0
        %736 = vst.msk [vmem:[%s733 + $0x10] sm:$0xff] %vm305, 0.0
        %737 = vst.msk [vmem:[%s733 + $0x18] sm:$0xff] %vm305, 0.0
      $region52: #{mixed_mobile_convs_forward.1} parent=47 // pred_fallthru
        _
      %v738 = vld [vmem:[%s3] sm:$0xff]
      %v739 = vld [vmem:[%s3 + $0x8] sm:$0x1]
      %s740 = scalar_lea.vmem [#allocation2], 32
      %v741 = vld [vmem:[%s740 + $0x7] sm:$0xff]
      %v742 = vld [vmem:[%s740 + $0xf] sm:$0xff]
      %v743 = vld [vmem:[%s740 + $0x27] sm:$0xff]
      %v744 = vld [vmem:[%s740 + $0x2f] sm:$0xff]
      %v745 = vld [vmem:[%s740 + $0x47] sm:$0xff]
      %v746 = vld [vmem:[%s740 + $0x4f] sm:$0xff]
      %v747 = vld [vmem:[%s740 + $0x67] sm:$0xff]
      %v748 = vld [vmem:[%s740 + $0x6f] sm:$0xff]
      %v749 = vld [vmem:[%s740 + $0x87] sm:$0xff]
      %v750 = vld [vmem:[%s740 + $0x8f] sm:$0xff]
      %v751 = vld [vmem:[%s740 + $0xa7] sm:$0xff]
      %v752 = vld [vmem:[%s740 + $0xaf] sm:$0xff]
      %v753 = vld [vmem:[%s740 + $0xc7] sm:$0xff]
      %v754 = vld [vmem:[%s740 + $0xcf] sm:$0xff]
      %v755 = vld [vmem:[%s740 + $0xe7] sm:$0xff]
      %v756 = vld [vmem:[%s740 + $0xef] sm:$0xff]
      %v757 = vld [vmem:[%s740 + $0x107] sm:$0xff]
      %v758 = vld [vmem:[%s740 + $0x10f] sm:$0xff]
      %v759 = vld [vmem:[%s740 + $0x127] sm:$0xff]
      %v760 = vld [vmem:[%s740 + $0x12f] sm:$0xff]
      %v761 = vld [vmem:[%s740 + $0x147] sm:$0xff]
      %v762 = vld [vmem:[%s740 + $0x14f] sm:$0xff]
      %v763 = vld [vmem:[%s740 + $0x167] sm:$0xff]
      %v764 = vld [vmem:[%s740 + $0x16f] sm:$0xff]
      %v765 = vld [vmem:[%s740 + $0x187] sm:$0xff]
      %v766 = vld [vmem:[%s740 + $0x18f] sm:$0xff]
      %v767 = vld [vmem:[%s740 + $0x1a7] sm:$0xff]
      %v768 = vld [vmem:[%s740 + $0x1af] sm:$0xff]
      %v769 = vld [vmem:[%s740 + $0x1c7] sm:$0xff]
      %v770 = vld [vmem:[%s740 + $0x1cf] sm:$0xff]
      %v771 = vld [vmem:[%s740 + $0x1e7] sm:$0xff]
      %v772 = vld [vmem:[%s740 + $0x1ef] sm:$0xff]
      %v773 = vlaneseq
      %v774 = vshrl.u32 %v773, 7
      %v775 = vsub.s32 0, %v774
      %v776 = vrot.slane %v738, %v775
      %v777 = vmul.f32 %v741, %v776
      %v778 = vmul.f32 %v742, %v776
      %v779 = vmul.f32 %v743, %v776
      %v780 = vmul.f32 %v744, %v776
      %v781 = vmul.f32 %v745, %v776
      %v782 = vmul.f32 %v746, %v776
      %v783 = vmul.f32 %v747, %v776
      %v784 = vmul.f32 %v748, %v776
      %v785 = vmul.f32 %v749, %v776
      %v786 = vmul.f32 %v750, %v776
      %v787 = vmul.f32 %v751, %v776
      %v788 = vmul.f32 %v752, %v776
      %v789 = vmul.f32 %v753, %v776
      %v790 = vmul.f32 %v754, %v776
      %v791 = vmul.f32 %v755, %v776
      %v792 = vmul.f32 %v756, %v776
      %v793 = vmul.f32 %v757, %v776
      %v794 = vmul.f32 %v758, %v776
      %v795 = vmul.f32 %v759, %v776
      %v796 = vmul.f32 %v760, %v776
      %v797 = vmul.f32 %v761, %v776
      %v798 = vmul.f32 %v762, %v776
      %v799 = vmul.f32 %v763, %v776
      %v800 = vmul.f32 %v764, %v776
      %v801 = vmul.f32 %v765, %v776
      %v802 = vmul.f32 %v766, %v776
      %v803 = vmul.f32 %v767, %v776
      %v804 = vmul.f32 %v768, %v776
      %v805 = vmul.f32 %v769, %v776
      %v806 = vmul.f32 %v770, %v776
      %v807 = vmul.f32 %v771, %v776
      %v808 = vmul.f32 %v772, %v776
      %v809 = vld [vmem:[%s740 + $0x8] sm:$0xff]
      %v810 = vld [vmem:[%s740 + $0x10] sm:$0xff]
      %v811 = vld [vmem:[%s740 + $0x28] sm:$0xff]
      %v812 = vld [vmem:[%s740 + $0x30] sm:$0xff]
      %v813 = vld [vmem:[%s740 + $0x48] sm:$0xff]
      %v814 = vld [vmem:[%s740 + $0x50] sm:$0xff]
      %v815 = vld [vmem:[%s740 + $0x68] sm:$0xff]
      %v816 = vld [vmem:[%s740 + $0x70] sm:$0xff]
      %v817 = vld [vmem:[%s740 + $0x88] sm:$0xff]
      %v818 = vld [vmem:[%s740 + $0x90] sm:$0xff]
      %v819 = vld [vmem:[%s740 + $0xa8] sm:$0xff]
      %v820 = vld [vmem:[%s740 + $0xb0] sm:$0xff]
      %v821 = vld [vmem:[%s740 + $0xc8] sm:$0xff]
      %v822 = vld [vmem:[%s740 + $0xd0] sm:$0xff]
      %v823 = vld [vmem:[%s740 + $0xe8] sm:$0xff]
      %v824 = vld [vmem:[%s740 + $0xf0] sm:$0xff]
      %v825 = vld [vmem:[%s740 + $0x108] sm:$0xff]
      %v826 = vld [vmem:[%s740 + $0x110] sm:$0xff]
      %v827 = vld [vmem:[%s740 + $0x128] sm:$0xff]
      %v828 = vld [vmem:[%s740 + $0x130] sm:$0xff]
      %v829 = vld [vmem:[%s740 + $0x148] sm:$0xff]
      %v830 = vld [vmem:[%s740 + $0x150] sm:$0xff]
      %v831 = vld [vmem:[%s740 + $0x168] sm:$0xff]
      %v832 = vld [vmem:[%s740 + $0x170] sm:$0xff]
      %v833 = vld [vmem:[%s740 + $0x188] sm:$0xff]
      %v834 = vld [vmem:[%s740 + $0x190] sm:$0xff]
      %v835 = vld [vmem:[%s740 + $0x1a8] sm:$0xff]
      %v836 = vld [vmem:[%s740 + $0x1b0] sm:$0xff]
      %v837 = vld [vmem:[%s740 + $0x1c8] sm:$0xff]
      %v838 = vld [vmem:[%s740 + $0x1d0] sm:$0xff]
      %v839 = vld [vmem:[%s740 + $0x1e8] sm:$0xff]
      %v840 = vld [vmem:[%s740 + $0x1f0] sm:$0xff]
      %v841 = vlaneseq
      %v842 = vshrl.u32 %v841, 7
      %v843 = vsub.s32 1, %v842
      %v844 = vrot.slane %v738, %v843
      %v845 = vmul.f32 %v809, %v844
      %v846 = vmul.f32 %v810, %v844
      %v847 = vmul.f32 %v811, %v844
      %v848 = vmul.f32 %v812, %v844
      %v849 = vmul.f32 %v813, %v844
      %v850 = vmul.f32 %v814, %v844
      %v851 = vmul.f32 %v815, %v844
      %v852 = vmul.f32 %v816, %v844
      %v853 = vmul.f32 %v817, %v844
      %v854 = vmul.f32 %v818, %v844
      %v855 = vmul.f32 %v819, %v844
      %v856 = vmul.f32 %v820, %v844
      %v857 = vmul.f32 %v821, %v844
      %v858 = vmul.f32 %v822, %v844
      %v859 = vmul.f32 %v823, %v844
      %v860 = vmul.f32 %v824, %v844
      %v861 = vmul.f32 %v825, %v844
      %v862 = vmul.f32 %v826, %v844
      %v863 = vmul.f32 %v827, %v844
      %v864 = vmul.f32 %v828, %v844
      %v865 = vmul.f32 %v829, %v844
      %v866 = vmul.f32 %v830, %v844
      %v867 = vmul.f32 %v831, %v844
      %v868 = vmul.f32 %v832, %v844
      %v869 = vmul.f32 %v833, %v844
      %v870 = vmul.f32 %v834, %v844
      %v871 = vmul.f32 %v835, %v844
      %v872 = vmul.f32 %v836, %v844
      %v873 = vmul.f32 %v837, %v844
      %v874 = vmul.f32 %v838, %v844
      %v875 = vmul.f32 %v839, %v844
      %v876 = vmul.f32 %v840, %v844
      %v877 = vadd.f32 %v777, %v845
      %v878 = vadd.f32 %v778, %v846
      %v879 = vadd.f32 %v779, %v847
      %v880 = vadd.f32 %v780, %v848
      %v881 = vadd.f32 %v781, %v849
      %v882 = vadd.f32 %v782, %v850
      %v883 = vadd.f32 %v783, %v851
      %v884 = vadd.f32 %v784, %v852
      %v885 = vadd.f32 %v785, %v853
      %v886 = vadd.f32 %v786, %v854
      %v887 = vadd.f32 %v787, %v855
      %v888 = vadd.f32 %v788, %v856
      %v889 = vadd.f32 %v789, %v857
      %v890 = vadd.f32 %v790, %v858
      %v891 = vadd.f32 %v791, %v859
      %v892 = vadd.f32 %v792, %v860
      %v893 = vadd.f32 %v793, %v861
      %v894 = vadd.f32 %v794, %v862
      %v895 = vadd.f32 %v795, %v863
      %v896 = vadd.f32 %v796, %v864
      %v897 = vadd.f32 %v797, %v865
      %v898 = vadd.f32 %v798, %v866
      %v899 = vadd.f32 %v799, %v867
      %v900 = vadd.f32 %v800, %v868
      %v901 = vadd.f32 %v801, %v869
      %v902 = vadd.f32 %v802, %v870
      %v903 = vadd.f32 %v803, %v871
      %v904 = vadd.f32 %v804, %v872
      %v905 = vadd.f32 %v805, %v873
      %v906 = vadd.f32 %v806, %v874
      %v907 = vadd.f32 %v807, %v875
      %v908 = vadd.f32 %v808, %v876
      %v909 = vld [vmem:[%s740 + $0x9] sm:$0xff]
      %v910 = vld [vmem:[%s740 + $0x11] sm:$0xff]
      %v911 = vld [vmem:[%s740 + $0x29] sm:$0xff]
      %v912 = vld [vmem:[%s740 + $0x31] sm:$0xff]
      %v913 = vld [vmem:[%s740 + $0x49] sm:$0xff]
      %v914 = vld [vmem:[%s740 + $0x51] sm:$0xff]
      %v915 = vld [vmem:[%s740 + $0x69] sm:$0xff]
      %v916 = vld [vmem:[%s740 + $0x71] sm:$0xff]
      %v917 = vld [vmem:[%s740 + $0x89] sm:$0xff]
      %v918 = vld [vmem:[%s740 + $0x91] sm:$0xff]
      %v919 = vld [vmem:[%s740 + $0xa9] sm:$0xff]
      %v920 = vld [vmem:[%s740 + $0xb1] sm:$0xff]
      %v921 = vld [vmem:[%s740 + $0xc9] sm:$0xff]
      %v922 = vld [vmem:[%s740 + $0xd1] sm:$0xff]
      %v923 = vld [vmem:[%s740 + $0xe9] sm:$0xff]
      %v924 = vld [vmem:[%s740 + $0xf1] sm:$0xff]
      %v925 = vld [vmem:[%s740 + $0x109] sm:$0xff]
      %v926 = vld [vmem:[%s740 + $0x111] sm:$0xff]
      %v927 = vld [vmem:[%s740 + $0x129] sm:$0xff]
      %v928 = vld [vmem:[%s740 + $0x131] sm:$0xff]
      %v929 = vld [vmem:[%s740 + $0x149] sm:$0xff]
      %v930 = vld [vmem:[%s740 + $0x151] sm:$0xff]
      %v931 = vld [vmem:[%s740 + $0x169] sm:$0xff]
      %v932 = vld [vmem:[%s740 + $0x171] sm:$0xff]
      %v933 = vld [vmem:[%s740 + $0x189] sm:$0xff]
      %v934 = vld [vmem:[%s740 + $0x191] sm:$0xff]
      %v935 = vld [vmem:[%s740 + $0x1a9] sm:$0xff]
      %v936 = vld [vmem:[%s740 + $0x1b1] sm:$0xff]
      %v937 = vld [vmem:[%s740 + $0x1c9] sm:$0xff]
      %v938 = vld [vmem:[%s740 + $0x1d1] sm:$0xff]
      %v939 = vld [vmem:[%s740 + $0x1e9] sm:$0xff]
      %v940 = vld [vmem:[%s740 + $0x1f1] sm:$0xff]
      %v941 = vlaneseq
      %v942 = vshrl.u32 %v941, 7
      %v943 = vsub.s32 2, %v942
      %v944 = vrot.slane %v738, %v943
      %v945 = vmul.f32 %v909, %v944
      %v946 = vmul.f32 %v910, %v944
      %v947 = vmul.f32 %v911, %v944
      %v948 = vmul.f32 %v912, %v944
      %v949 = vmul.f32 %v913, %v944
      %v950 = vmul.f32 %v914, %v944
      %v951 = vmul.f32 %v915, %v944
      %v952 = vmul.f32 %v916, %v944
      %v953 = vmul.f32 %v917, %v944
      %v954 = vmul.f32 %v918, %v944
      %v955 = vmul.f32 %v919, %v944
      %v956 = vmul.f32 %v920, %v944
      %v957 = vmul.f32 %v921, %v944
      %v958 = vmul.f32 %v922, %v944
      %v959 = vmul.f32 %v923, %v944
      %v960 = vmul.f32 %v924, %v944
      %v961 = vmul.f32 %v925, %v944
      %v962 = vmul.f32 %v926, %v944
      %v963 = vmul.f32 %v927, %v944
      %v964 = vmul.f32 %v928, %v944
      %v965 = vmul.f32 %v929, %v944
      %v966 = vmul.f32 %v930, %v944
      %v967 = vmul.f32 %v931, %v944
      %v968 = vmul.f32 %v932, %v944
      %v969 = vmul.f32 %v933, %v944
      %v970 = vmul.f32 %v934, %v944
      %v971 = vmul.f32 %v935, %v944
      %v972 = vmul.f32 %v936, %v944
      %v973 = vmul.f32 %v937, %v944
      %v974 = vmul.f32 %v938, %v944
      %v975 = vmul.f32 %v939, %v944
      %v976 = vmul.f32 %v940, %v944
      %v977 = vadd.f32 %v877, %v945
      %v978 = vadd.f32 %v878, %v946
      %v979 = vadd.f32 %v879, %v947
      %v980 = vadd.f32 %v880, %v948
      %v981 = vadd.f32 %v881, %v949
      %v982 = vadd.f32 %v882, %v950
      %v983 = vadd.f32 %v883, %v951
      %v984 = vadd.f32 %v884, %v952
      %v985 = vadd.f32 %v885, %v953
      %v986 = vadd.f32 %v886, %v954
      %v987 = vadd.f32 %v887, %v955
      %v988 = vadd.f32 %v888, %v956
      %v989 = vadd.f32 %v889, %v957
      %v990 = vadd.f32 %v890, %v958
      %v991 = vadd.f32 %v891, %v959
      %v992 = vadd.f32 %v892, %v960
      %v993 = vadd.f32 %v893, %v961
      %v994 = vadd.f32 %v894, %v962
      %v995 = vadd.f32 %v895, %v963
      %v996 = vadd.f32 %v896, %v964
      %v997 = vadd.f32 %v897, %v965
      %v998 = vadd.f32 %v898, %v966
      %v999 = vadd.f32 %v899, %v967
      %v1000 = vadd.f32 %v900, %v968
      %v1001 = vadd.f32 %v901, %v969
      %v1002 = vadd.f32 %v902, %v970
      %v1003 = vadd.f32 %v903, %v971
      %v1004 = vadd.f32 %v904, %v972
      %v1005 = vadd.f32 %v905, %v973
      %v1006 = vadd.f32 %v906, %v974
      %v1007 = vadd.f32 %v907, %v975
      %v1008 = vadd.f32 %v908, %v976
      %s1009 = scalar_lea.vmem [#allocation2], 64
      %v1010 = vld [vmem:[%s1009 + $0x7] sm:$0xff]
      %v1011 = vld [vmem:[%s1009 + $0xf] sm:$0xff]
      %v1012 = vld [vmem:[%s1009 + $0x27] sm:$0xff]
      %v1013 = vld [vmem:[%s1009 + $0x2f] sm:$0xff]
      %v1014 = vld [vmem:[%s1009 + $0x47] sm:$0xff]
      %v1015 = vld [vmem:[%s1009 + $0x4f] sm:$0xff]
      %v1016 = vld [vmem:[%s1009 + $0x67] sm:$0xff]
      %v1017 = vld [vmem:[%s1009 + $0x6f] sm:$0xff]
      %v1018 = vld [vmem:[%s1009 + $0x87] sm:$0xff]
      %v1019 = vld [vmem:[%s1009 + $0x8f] sm:$0xff]
      %v1020 = vld [vmem:[%s1009 + $0xa7] sm:$0xff]
      %v1021 = vld [vmem:[%s1009 + $0xaf] sm:$0xff]
      %v1022 = vld [vmem:[%s1009 + $0xc7] sm:$0xff]
      %v1023 = vld [vmem:[%s1009 + $0xcf] sm:$0xff]
      %v1024 = vld [vmem:[%s1009 + $0xe7] sm:$0xff]
      %v1025 = vld [vmem:[%s1009 + $0xef] sm:$0xff]
      %v1026 = vld [vmem:[%s1009 + $0x107] sm:$0xff]
      %v1027 = vld [vmem:[%s1009 + $0x10f] sm:$0xff]
      %v1028 = vld [vmem:[%s1009 + $0x127] sm:$0xff]
      %v1029 = vld [vmem:[%s1009 + $0x12f] sm:$0xff]
      %v1030 = vld [vmem:[%s1009 + $0x147] sm:$0xff]
      %v1031 = vld [vmem:[%s1009 + $0x14f] sm:$0xff]
      %v1032 = vld [vmem:[%s1009 + $0x167] sm:$0xff]
      %v1033 = vld [vmem:[%s1009 + $0x16f] sm:$0xff]
      %v1034 = vld [vmem:[%s1009 + $0x187] sm:$0xff]
      %v1035 = vld [vmem:[%s1009 + $0x18f] sm:$0xff]
      %v1036 = vld [vmem:[%s1009 + $0x1a7] sm:$0xff]
      %v1037 = vld [vmem:[%s1009 + $0x1af] sm:$0xff]
      %v1038 = vld [vmem:[%s1009 + $0x1c7] sm:$0xff]
      %v1039 = vld [vmem:[%s1009 + $0x1cf] sm:$0xff]
      %v1040 = vld [vmem:[%s1009 + $0x1e7] sm:$0xff]
      %v1041 = vld [vmem:[%s1009 + $0x1ef] sm:$0xff]
      %v1042 = vlaneseq
      %v1043 = vshrl.u32 %v1042, 7
      %v1044 = vsub.s32 3, %v1043
      %v1045 = vrot.slane %v738, %v1044
      %v1046 = vmul.f32 %v1010, %v1045
      %v1047 = vmul.f32 %v1011, %v1045
      %v1048 = vmul.f32 %v1012, %v1045
      %v1049 = vmul.f32 %v1013, %v1045
      %v1050 = vmul.f32 %v1014, %v1045
      %v1051 = vmul.f32 %v1015, %v1045
      %v1052 = vmul.f32 %v1016, %v1045
      %v1053 = vmul.f32 %v1017, %v1045
      %v1054 = vmul.f32 %v1018, %v1045
      %v1055 = vmul.f32 %v1019, %v1045
      %v1056 = vmul.f32 %v1020, %v1045
      %v1057 = vmul.f32 %v1021, %v1045
      %v1058 = vmul.f32 %v1022, %v1045
      %v1059 = vmul.f32 %v1023, %v1045
      %v1060 = vmul.f32 %v1024, %v1045
      %v1061 = vmul.f32 %v1025, %v1045
      %v1062 = vmul.f32 %v1026, %v1045
      %v1063 = vmul.f32 %v1027, %v1045
      %v1064 = vmul.f32 %v1028, %v1045
      %v1065 = vmul.f32 %v1029, %v1045
      %v1066 = vmul.f32 %v1030, %v1045
      %v1067 = vmul.f32 %v1031, %v1045
      %v1068 = vmul.f32 %v1032, %v1045
      %v1069 = vmul.f32 %v1033, %v1045
      %v1070 = vmul.f32 %v1034, %v1045
      %v1071 = vmul.f32 %v1035, %v1045
      %v1072 = vmul.f32 %v1036, %v1045
      %v1073 = vmul.f32 %v1037, %v1045
      %v1074 = vmul.f32 %v1038, %v1045
      %v1075 = vmul.f32 %v1039, %v1045
      %v1076 = vmul.f32 %v1040, %v1045
      %v1077 = vmul.f32 %v1041, %v1045
      %v1078 = vadd.f32 %v977, %v1046
      %v1079 = vadd.f32 %v978, %v1047
      %v1080 = vadd.f32 %v979, %v1048
      %v1081 = vadd.f32 %v980, %v1049
      %v1082 = vadd.f32 %v981, %v1050
      %v1083 = vadd.f32 %v982, %v1051
      %v1084 = vadd.f32 %v983, %v1052
      %v1085 = vadd.f32 %v984, %v1053
      %v1086 = vadd.f32 %v985, %v1054
      %v1087 = vadd.f32 %v986, %v1055
      %v1088 = vadd.f32 %v987, %v1056
      %v1089 = vadd.f32 %v988, %v1057
      %v1090 = vadd.f32 %v989, %v1058
      %v1091 = vadd.f32 %v990, %v1059
      %v1092 = vadd.f32 %v991, %v1060
      %v1093 = vadd.f32 %v992, %v1061
      %v1094 = vadd.f32 %v993, %v1062
      %v1095 = vadd.f32 %v994, %v1063
      %v1096 = vadd.f32 %v995, %v1064
      %v1097 = vadd.f32 %v996, %v1065
      %v1098 = vadd.f32 %v997, %v1066
      %v1099 = vadd.f32 %v998, %v1067
      %v1100 = vadd.f32 %v999, %v1068
      %v1101 = vadd.f32 %v1000, %v1069
      %v1102 = vadd.f32 %v1001, %v1070
      %v1103 = vadd.f32 %v1002, %v1071
      %v1104 = vadd.f32 %v1003, %v1072
      %v1105 = vadd.f32 %v1004, %v1073
      %v1106 = vadd.f32 %v1005, %v1074
      %v1107 = vadd.f32 %v1006, %v1075
      %v1108 = vadd.f32 %v1007, %v1076
      %v1109 = vadd.f32 %v1008, %v1077
      %v1110 = vld [vmem:[%s1009 + $0x8] sm:$0xff]
      %v1111 = vld [vmem:[%s1009 + $0x10] sm:$0xff]
      %v1112 = vld [vmem:[%s1009 + $0x28] sm:$0xff]
      %v1113 = vld [vmem:[%s1009 + $0x30] sm:$0xff]
      %v1114 = vld [vmem:[%s1009 + $0x48] sm:$0xff]
      %v1115 = vld [vmem:[%s1009 + $0x50] sm:$0xff]
      %v1116 = vld [vmem:[%s1009 + $0x68] sm:$0xff]
      %v1117 = vld [vmem:[%s1009 + $0x70] sm:$0xff]
      %v1118 = vld [vmem:[%s1009 + $0x88] sm:$0xff]
      %v1119 = vld [vmem:[%s1009 + $0x90] sm:$0xff]
      %v1120 = vld [vmem:[%s1009 + $0xa8] sm:$0xff]
      %v1121 = vld [vmem:[%s1009 + $0xb0] sm:$0xff]
      %v1122 = vld [vmem:[%s1009 + $0xc8] sm:$0xff]
      %v1123 = vld [vmem:[%s1009 + $0xd0] sm:$0xff]
      %v1124 = vld [vmem:[%s1009 + $0xe8] sm:$0xff]
      %v1125 = vld [vmem:[%s1009 + $0xf0] sm:$0xff]
      %v1126 = vld [vmem:[%s1009 + $0x108] sm:$0xff]
      %v1127 = vld [vmem:[%s1009 + $0x110] sm:$0xff]
      %v1128 = vld [vmem:[%s1009 + $0x128] sm:$0xff]
      %v1129 = vld [vmem:[%s1009 + $0x130] sm:$0xff]
      %v1130 = vld [vmem:[%s1009 + $0x148] sm:$0xff]
      %v1131 = vld [vmem:[%s1009 + $0x150] sm:$0xff]
      %v1132 = vld [vmem:[%s1009 + $0x168] sm:$0xff]
      %v1133 = vld [vmem:[%s1009 + $0x170] sm:$0xff]
      %v1134 = vld [vmem:[%s1009 + $0x188] sm:$0xff]
      %v1135 = vld [vmem:[%s1009 + $0x190] sm:$0xff]
      %v1136 = vld [vmem:[%s1009 + $0x1a8] sm:$0xff]
      %v1137 = vld [vmem:[%s1009 + $0x1b0] sm:$0xff]
      %v1138 = vld [vmem:[%s1009 + $0x1c8] sm:$0xff]
      %v1139 = vld [vmem:[%s1009 + $0x1d0] sm:$0xff]
      %v1140 = vld [vmem:[%s1009 + $0x1e8] sm:$0xff]
      %v1141 = vld [vmem:[%s1009 + $0x1f0] sm:$0xff]
      %v1142 = vlaneseq
      %v1143 = vshrl.u32 %v1142, 7
      %v1144 = vsub.s32 4, %v1143
      %v1145 = vrot.slane %v738, %v1144
      %v1146 = vmul.f32 %v1110, %v1145
      %v1147 = vmul.f32 %v1111, %v1145
      %v1148 = vmul.f32 %v1112, %v1145
      %v1149 = vmul.f32 %v1113, %v1145
      %v1150 = vmul.f32 %v1114, %v1145
      %v1151 = vmul.f32 %v1115, %v1145
      %v1152 = vmul.f32 %v1116, %v1145
      %v1153 = vmul.f32 %v1117, %v1145
      %v1154 = vmul.f32 %v1118, %v1145
      %v1155 = vmul.f32 %v1119, %v1145
      %v1156 = vmul.f32 %v1120, %v1145
      %v1157 = vmul.f32 %v1121, %v1145
      %v1158 = vmul.f32 %v1122, %v1145
      %v1159 = vmul.f32 %v1123, %v1145
      %v1160 = vmul.f32 %v1124, %v1145
      %v1161 = vmul.f32 %v1125, %v1145
      %v1162 = vmul.f32 %v1126, %v1145
      %v1163 = vmul.f32 %v1127, %v1145
      %v1164 = vmul.f32 %v1128, %v1145
      %v1165 = vmul.f32 %v1129, %v1145
      %v1166 = vmul.f32 %v1130, %v1145
      %v1167 = vmul.f32 %v1131, %v1145
      %v1168 = vmul.f32 %v1132, %v1145
      %v1169 = vmul.f32 %v1133, %v1145
      %v1170 = vmul.f32 %v1134, %v1145
      %v1171 = vmul.f32 %v1135, %v1145
      %v1172 = vmul.f32 %v1136, %v1145
      %v1173 = vmul.f32 %v1137, %v1145
      %v1174 = vmul.f32 %v1138, %v1145
      %v1175 = vmul.f32 %v1139, %v1145
      %v1176 = vmul.f32 %v1140, %v1145
      %v1177 = vmul.f32 %v1141, %v1145
      %v1178 = vadd.f32 %v1078, %v1146
      %v1179 = vadd.f32 %v1079, %v1147
      %v1180 = vadd.f32 %v1080, %v1148
      %v1181 = vadd.f32 %v1081, %v1149
      %v1182 = vadd.f32 %v1082, %v1150
      %v1183 = vadd.f32 %v1083, %v1151
      %v1184 = vadd.f32 %v1084, %v1152
      %v1185 = vadd.f32 %v1085, %v1153
      %v1186 = vadd.f32 %v1086, %v1154
      %v1187 = vadd.f32 %v1087, %v1155
      %v1188 = vadd.f32 %v1088, %v1156
      %v1189 = vadd.f32 %v1089, %v1157
      %v1190 = vadd.f32 %v1090, %v1158
      %v1191 = vadd.f32 %v1091, %v1159
      %v1192 = vadd.f32 %v1092, %v1160
      %v1193 = vadd.f32 %v1093, %v1161
      %v1194 = vadd.f32 %v1094, %v1162
      %v1195 = vadd.f32 %v1095, %v1163
      %v1196 = vadd.f32 %v1096, %v1164
      %v1197 = vadd.f32 %v1097, %v1165
      %v1198 = vadd.f32 %v1098, %v1166
      %v1199 = vadd.f32 %v1099, %v1167
      %v1200 = vadd.f32 %v1100, %v1168
      %v1201 = vadd.f32 %v1101, %v1169
      %v1202 = vadd.f32 %v1102, %v1170
      %v1203 = vadd.f32 %v1103, %v1171
      %v1204 = vadd.f32 %v1104, %v1172
      %v1205 = vadd.f32 %v1105, %v1173
      %v1206 = vadd.f32 %v1106, %v1174
      %v1207 = vadd.f32 %v1107, %v1175
      %v1208 = vadd.f32 %v1108, %v1176
      %v1209 = vadd.f32 %v1109, %v1177
      %v1210 = vld [vmem:[%s1009 + $0x9] sm:$0xff]
      %v1211 = vld [vmem:[%s1009 + $0x11] sm:$0xff]
      %v1212 = vld [vmem:[%s1009 + $0x29] sm:$0xff]
      %v1213 = vld [vmem:[%s1009 + $0x31] sm:$0xff]
      %v1214 = vld [vmem:[%s1009 + $0x49] sm:$0xff]
      %v1215 = vld [vmem:[%s1009 + $0x51] sm:$0xff]
      %v1216 = vld [vmem:[%s1009 + $0x69] sm:$0xff]
      %v1217 = vld [vmem:[%s1009 + $0x71] sm:$0xff]
      %v1218 = vld [vmem:[%s1009 + $0x89] sm:$0xff]
      %v1219 = vld [vmem:[%s1009 + $0x91] sm:$0xff]
      %v1220 = vld [vmem:[%s1009 + $0xa9] sm:$0xff]
      %v1221 = vld [vmem:[%s1009 + $0xb1] sm:$0xff]
      %v1222 = vld [vmem:[%s1009 + $0xc9] sm:$0xff]
      %v1223 = vld [vmem:[%s1009 + $0xd1] sm:$0xff]
      %v1224 = vld [vmem:[%s1009 + $0xe9] sm:$0xff]
      %v1225 = vld [vmem:[%s1009 + $0xf1] sm:$0xff]
      %v1226 = vld [vmem:[%s1009 + $0x109] sm:$0xff]
      %v1227 = vld [vmem:[%s1009 + $0x111] sm:$0xff]
      %v1228 = vld [vmem:[%s1009 + $0x129] sm:$0xff]
      %v1229 = vld [vmem:[%s1009 + $0x131] sm:$0xff]
      %v1230 = vld [vmem:[%s1009 + $0x149] sm:$0xff]
      %v1231 = vld [vmem:[%s1009 + $0x151] sm:$0xff]
      %v1232 = vld [vmem:[%s1009 + $0x169] sm:$0xff]
      %v1233 = vld [vmem:[%s1009 + $0x171] sm:$0xff]
      %v1234 = vld [vmem:[%s1009 + $0x189] sm:$0xff]
      %v1235 = vld [vmem:[%s1009 + $0x191] sm:$0xff]
      %v1236 = vld [vmem:[%s1009 + $0x1a9] sm:$0xff]
      %v1237 = vld [vmem:[%s1009 + $0x1b1] sm:$0xff]
      %v1238 = vld [vmem:[%s1009 + $0x1c9] sm:$0xff]
      %v1239 = vld [vmem:[%s1009 + $0x1d1] sm:$0xff]
      %v1240 = vld [vmem:[%s1009 + $0x1e9] sm:$0xff]
      %v1241 = vld [vmem:[%s1009 + $0x1f1] sm:$0xff]
      %v1242 = vlaneseq
      %v1243 = vshrl.u32 %v1242, 7
      %v1244 = vsub.s32 5, %v1243
      %v1245 = vrot.slane %v738, %v1244
      %v1246 = vmul.f32 %v1210, %v1245
      %v1247 = vmul.f32 %v1211, %v1245
      %v1248 = vmul.f32 %v1212, %v1245
      %v1249 = vmul.f32 %v1213, %v1245
      %v1250 = vmul.f32 %v1214, %v1245
      %v1251 = vmul.f32 %v1215, %v1245
      %v1252 = vmul.f32 %v1216, %v1245
      %v1253 = vmul.f32 %v1217, %v1245
      %v1254 = vmul.f32 %v1218, %v1245
      %v1255 = vmul.f32 %v1219, %v1245
      %v1256 = vmul.f32 %v1220, %v1245
      %v1257 = vmul.f32 %v1221, %v1245
      %v1258 = vmul.f32 %v1222, %v1245
      %v1259 = vmul.f32 %v1223, %v1245
      %v1260 = vmul.f32 %v1224, %v1245
      %v1261 = vmul.f32 %v1225, %v1245
      %v1262 = vmul.f32 %v1226, %v1245
      %v1263 = vmul.f32 %v1227, %v1245
      %v1264 = vmul.f32 %v1228, %v1245
      %v1265 = vmul.f32 %v1229, %v1245
      %v1266 = vmul.f32 %v1230, %v1245
      %v1267 = vmul.f32 %v1231, %v1245
      %v1268 = vmul.f32 %v1232, %v1245
      %v1269 = vmul.f32 %v1233, %v1245
      %v1270 = vmul.f32 %v1234, %v1245
      %v1271 = vmul.f32 %v1235, %v1245
      %v1272 = vmul.f32 %v1236, %v1245
      %v1273 = vmul.f32 %v1237, %v1245
      %v1274 = vmul.f32 %v1238, %v1245
      %v1275 = vmul.f32 %v1239, %v1245
      %v1276 = vmul.f32 %v1240, %v1245
      %v1277 = vmul.f32 %v1241, %v1245
      %v1278 = vadd.f32 %v1178, %v1246
      %v1279 = vadd.f32 %v1179, %v1247
      %v1280 = vadd.f32 %v1180, %v1248
      %v1281 = vadd.f32 %v1181, %v1249
      %v1282 = vadd.f32 %v1182, %v1250
      %v1283 = vadd.f32 %v1183, %v1251
      %v1284 = vadd.f32 %v1184, %v1252
      %v1285 = vadd.f32 %v1185, %v1253
      %v1286 = vadd.f32 %v1186, %v1254
      %v1287 = vadd.f32 %v1187, %v1255
      %v1288 = vadd.f32 %v1188, %v1256
      %v1289 = vadd.f32 %v1189, %v1257
      %v1290 = vadd.f32 %v1190, %v1258
      %v1291 = vadd.f32 %v1191, %v1259
      %v1292 = vadd.f32 %v1192, %v1260
      %v1293 = vadd.f32 %v1193, %v1261
      %v1294 = vadd.f32 %v1194, %v1262
      %v1295 = vadd.f32 %v1195, %v1263
      %v1296 = vadd.f32 %v1196, %v1264
      %v1297 = vadd.f32 %v1197, %v1265
      %v1298 = vadd.f32 %v1198, %v1266
      %v1299 = vadd.f32 %v1199, %v1267
      %v1300 = vadd.f32 %v1200, %v1268
      %v1301 = vadd.f32 %v1201, %v1269
      %v1302 = vadd.f32 %v1202, %v1270
      %v1303 = vadd.f32 %v1203, %v1271
      %v1304 = vadd.f32 %v1204, %v1272
      %v1305 = vadd.f32 %v1205, %v1273
      %v1306 = vadd.f32 %v1206, %v1274
      %v1307 = vadd.f32 %v1207, %v1275
      %v1308 = vadd.f32 %v1208, %v1276
      %v1309 = vadd.f32 %v1209, %v1277
      %s1310 = scalar_lea.vmem [#allocation2], 96
      %v1311 = vld [vmem:[%s1310 + $0x7] sm:$0xff]
      %v1312 = vld [vmem:[%s1310 + $0xf] sm:$0xff]
      %v1313 = vld [vmem:[%s1310 + $0x27] sm:$0xff]
      %v1314 = vld [vmem:[%s1310 + $0x2f] sm:$0xff]
      %v1315 = vld [vmem:[%s1310 + $0x47] sm:$0xff]
      %v1316 = vld [vmem:[%s1310 + $0x4f] sm:$0xff]
      %v1317 = vld [vmem:[%s1310 + $0x67] sm:$0xff]
      %v1318 = vld [vmem:[%s1310 + $0x6f] sm:$0xff]
      %v1319 = vld [vmem:[%s1310 + $0x87] sm:$0xff]
      %v1320 = vld [vmem:[%s1310 + $0x8f] sm:$0xff]
      %v1321 = vld [vmem:[%s1310 + $0xa7] sm:$0xff]
      %v1322 = vld [vmem:[%s1310 + $0xaf] sm:$0xff]
      %v1323 = vld [vmem:[%s1310 + $0xc7] sm:$0xff]
      %v1324 = vld [vmem:[%s1310 + $0xcf] sm:$0xff]
      %v1325 = vld [vmem:[%s1310 + $0xe7] sm:$0xff]
      %v1326 = vld [vmem:[%s1310 + $0xef] sm:$0xff]
      %v1327 = vld [vmem:[%s1310 + $0x107] sm:$0xff]
      %v1328 = vld [vmem:[%s1310 + $0x10f] sm:$0xff]
      %v1329 = vld [vmem:[%s1310 + $0x127] sm:$0xff]
      %v1330 = vld [vmem:[%s1310 + $0x12f] sm:$0xff]
      %v1331 = vld [vmem:[%s1310 + $0x147] sm:$0xff]
      %v1332 = vld [vmem:[%s1310 + $0x14f] sm:$0xff]
      %v1333 = vld [vmem:[%s1310 + $0x167] sm:$0xff]
      %v1334 = vld [vmem:[%s1310 + $0x16f] sm:$0xff]
      %v1335 = vld [vmem:[%s1310 + $0x187] sm:$0xff]
      %v1336 = vld [vmem:[%s1310 + $0x18f] sm:$0xff]
      %v1337 = vld [vmem:[%s1310 + $0x1a7] sm:$0xff]
      %v1338 = vld [vmem:[%s1310 + $0x1af] sm:$0xff]
      %v1339 = vld [vmem:[%s1310 + $0x1c7] sm:$0xff]
      %v1340 = vld [vmem:[%s1310 + $0x1cf] sm:$0xff]
      %v1341 = vld [vmem:[%s1310 + $0x1e7] sm:$0xff]
      %v1342 = vld [vmem:[%s1310 + $0x1ef] sm:$0xff]
      %v1343 = vlaneseq
      %v1344 = vshrl.u32 %v1343, 7
      %v1345 = vsub.s32 6, %v1344
      %v1346 = vrot.slane %v738, %v1345
      %v1347 = vmul.f32 %v1311, %v1346
      %v1348 = vmul.f32 %v1312, %v1346
      %v1349 = vmul.f32 %v1313, %v1346
      %v1350 = vmul.f32 %v1314, %v1346
      %v1351 = vmul.f32 %v1315, %v1346
      %v1352 = vmul.f32 %v1316, %v1346
      %v1353 = vmul.f32 %v1317, %v1346
      %v1354 = vmul.f32 %v1318, %v1346
      %v1355 = vmul.f32 %v1319, %v1346
      %v1356 = vmul.f32 %v1320, %v1346
      %v1357 = vmul.f32 %v1321, %v1346
      %v1358 = vmul.f32 %v1322, %v1346
      %v1359 = vmul.f32 %v1323, %v1346
      %v1360 = vmul.f32 %v1324, %v1346
      %v1361 = vmul.f32 %v1325, %v1346
      %v1362 = vmul.f32 %v1326, %v1346
      %v1363 = vmul.f32 %v1327, %v1346
      %v1364 = vmul.f32 %v1328, %v1346
      %v1365 = vmul.f32 %v1329, %v1346
      %v1366 = vmul.f32 %v1330, %v1346
      %v1367 = vmul.f32 %v1331, %v1346
      %v1368 = vmul.f32 %v1332, %v1346
      %v1369 = vmul.f32 %v1333, %v1346
      %v1370 = vmul.f32 %v1334, %v1346
      %v1371 = vmul.f32 %v1335, %v1346
      %v1372 = vmul.f32 %v1336, %v1346
      %v1373 = vmul.f32 %v1337, %v1346
      %v1374 = vmul.f32 %v1338, %v1346
      %v1375 = vmul.f32 %v1339, %v1346
      %v1376 = vmul.f32 %v1340, %v1346
      %v1377 = vmul.f32 %v1341, %v1346
      %v1378 = vmul.f32 %v1342, %v1346
      %v1379 = vadd.f32 %v1278, %v1347
      %v1380 = vadd.f32 %v1279, %v1348
      %v1381 = vadd.f32 %v1280, %v1349
      %v1382 = vadd.f32 %v1281, %v1350
      %v1383 = vadd.f32 %v1282, %v1351
      %v1384 = vadd.f32 %v1283, %v1352
      %v1385 = vadd.f32 %v1284, %v1353
      %v1386 = vadd.f32 %v1285, %v1354
      %v1387 = vadd.f32 %v1286, %v1355
      %v1388 = vadd.f32 %v1287, %v1356
      %v1389 = vadd.f32 %v1288, %v1357
      %v1390 = vadd.f32 %v1289, %v1358
      %v1391 = vadd.f32 %v1290, %v1359
      %v1392 = vadd.f32 %v1291, %v1360
      %v1393 = vadd.f32 %v1292, %v1361
      %v1394 = vadd.f32 %v1293, %v1362
      %v1395 = vadd.f32 %v1294, %v1363
      %v1396 = vadd.f32 %v1295, %v1364
      %v1397 = vadd.f32 %v1296, %v1365
      %v1398 = vadd.f32 %v1297, %v1366
      %v1399 = vadd.f32 %v1298, %v1367
      %v1400 = vadd.f32 %v1299, %v1368
      %v1401 = vadd.f32 %v1300, %v1369
      %v1402 = vadd.f32 %v1301, %v1370
      %v1403 = vadd.f32 %v1302, %v1371
      %v1404 = vadd.f32 %v1303, %v1372
      %v1405 = vadd.f32 %v1304, %v1373
      %v1406 = vadd.f32 %v1305, %v1374
      %v1407 = vadd.f32 %v1306, %v1375
      %v1408 = vadd.f32 %v1307, %v1376
      %v1409 = vadd.f32 %v1308, %v1377
      %v1410 = vadd.f32 %v1309, %v1378
      %v1411 = vld [vmem:[%s1310 + $0x8] sm:$0xff]
      %v1412 = vld [vmem:[%s1310 + $0x10] sm:$0xff]
      %v1413 = vld [vmem:[%s1310 + $0x28] sm:$0xff]
      %v1414 = vld [vmem:[%s1310 + $0x30] sm:$0xff]
      %v1415 = vld [vmem:[%s1310 + $0x48] sm:$0xff]
      %v1416 = vld [vmem:[%s1310 + $0x50] sm:$0xff]
      %v1417 = vld [vmem:[%s1310 + $0x68] sm:$0xff]
      %v1418 = vld [vmem:[%s1310 + $0x70] sm:$0xff]
      %v1419 = vld [vmem:[%s1310 + $0x88] sm:$0xff]
      %v1420 = vld [vmem:[%s1310 + $0x90] sm:$0xff]
      %v1421 = vld [vmem:[%s1310 + $0xa8] sm:$0xff]
      %v1422 = vld [vmem:[%s1310 + $0xb0] sm:$0xff]
      %v1423 = vld [vmem:[%s1310 + $0xc8] sm:$0xff]
      %v1424 = vld [vmem:[%s1310 + $0xd0] sm:$0xff]
      %v1425 = vld [vmem:[%s1310 + $0xe8] sm:$0xff]
      %v1426 = vld [vmem:[%s1310 + $0xf0] sm:$0xff]
      %v1427 = vld [vmem:[%s1310 + $0x108] sm:$0xff]
      %v1428 = vld [vmem:[%s1310 + $0x110] sm:$0xff]
      %v1429 = vld [vmem:[%s1310 + $0x128] sm:$0xff]
      %v1430 = vld [vmem:[%s1310 + $0x130] sm:$0xff]
      %v1431 = vld [vmem:[%s1310 + $0x148] sm:$0xff]
      %v1432 = vld [vmem:[%s1310 + $0x150] sm:$0xff]
      %v1433 = vld [vmem:[%s1310 + $0x168] sm:$0xff]
      %v1434 = vld [vmem:[%s1310 + $0x170] sm:$0xff]
      %v1435 = vld [vmem:[%s1310 + $0x188] sm:$0xff]
      %v1436 = vld [vmem:[%s1310 + $0x190] sm:$0xff]
      %v1437 = vld [vmem:[%s1310 + $0x1a8] sm:$0xff]
      %v1438 = vld [vmem:[%s1310 + $0x1b0] sm:$0xff]
      %v1439 = vld [vmem:[%s1310 + $0x1c8] sm:$0xff]
      %v1440 = vld [vmem:[%s1310 + $0x1d0] sm:$0xff]
      %v1441 = vld [vmem:[%s1310 + $0x1e8] sm:$0xff]
      %v1442 = vld [vmem:[%s1310 + $0x1f0] sm:$0xff]
      %v1443 = vlaneseq
      %v1444 = vshrl.u32 %v1443, 7
      %v1445 = vsub.s32 7, %v1444
      %v1446 = vrot.slane %v738, %v1445
      %v1447 = vmul.f32 %v1411, %v1446
      %v1448 = vmul.f32 %v1412, %v1446
      %v1449 = vmul.f32 %v1413, %v1446
      %v1450 = vmul.f32 %v1414, %v1446
      %v1451 = vmul.f32 %v1415, %v1446
      %v1452 = vmul.f32 %v1416, %v1446
      %v1453 = vmul.f32 %v1417, %v1446
      %v1454 = vmul.f32 %v1418, %v1446
      %v1455 = vmul.f32 %v1419, %v1446
      %v1456 = vmul.f32 %v1420, %v1446
      %v1457 = vmul.f32 %v1421, %v1446
      %v1458 = vmul.f32 %v1422, %v1446
      %v1459 = vmul.f32 %v1423, %v1446
      %v1460 = vmul.f32 %v1424, %v1446
      %v1461 = vmul.f32 %v1425, %v1446
      %v1462 = vmul.f32 %v1426, %v1446
      %v1463 = vmul.f32 %v1427, %v1446
      %v1464 = vmul.f32 %v1428, %v1446
      %v1465 = vmul.f32 %v1429, %v1446
      %v1466 = vmul.f32 %v1430, %v1446
      %v1467 = vmul.f32 %v1431, %v1446
      %v1468 = vmul.f32 %v1432, %v1446
      %v1469 = vmul.f32 %v1433, %v1446
      %v1470 = vmul.f32 %v1434, %v1446
      %v1471 = vmul.f32 %v1435, %v1446
      %v1472 = vmul.f32 %v1436, %v1446
      %v1473 = vmul.f32 %v1437, %v1446
      %v1474 = vmul.f32 %v1438, %v1446
      %v1475 = vmul.f32 %v1439, %v1446
      %v1476 = vmul.f32 %v1440, %v1446
      %v1477 = vmul.f32 %v1441, %v1446
      %v1478 = vmul.f32 %v1442, %v1446
      %v1479 = vadd.f32 %v1379, %v1447
      %v1480 = vadd.f32 %v1380, %v1448
      %v1481 = vadd.f32 %v1381, %v1449
      %v1482 = vadd.f32 %v1382, %v1450
      %v1483 = vadd.f32 %v1383, %v1451
      %v1484 = vadd.f32 %v1384, %v1452
      %v1485 = vadd.f32 %v1385, %v1453
      %v1486 = vadd.f32 %v1386, %v1454
      %v1487 = vadd.f32 %v1387, %v1455
      %v1488 = vadd.f32 %v1388, %v1456
      %v1489 = vadd.f32 %v1389, %v1457
      %v1490 = vadd.f32 %v1390, %v1458
      %v1491 = vadd.f32 %v1391, %v1459
      %v1492 = vadd.f32 %v1392, %v1460
      %v1493 = vadd.f32 %v1393, %v1461
      %v1494 = vadd.f32 %v1394, %v1462
      %v1495 = vadd.f32 %v1395, %v1463
      %v1496 = vadd.f32 %v1396, %v1464
      %v1497 = vadd.f32 %v1397, %v1465
      %v1498 = vadd.f32 %v1398, %v1466
      %v1499 = vadd.f32 %v1399, %v1467
      %v1500 = vadd.f32 %v1400, %v1468
      %v1501 = vadd.f32 %v1401, %v1469
      %v1502 = vadd.f32 %v1402, %v1470
      %v1503 = vadd.f32 %v1403, %v1471
      %v1504 = vadd.f32 %v1404, %v1472
      %v1505 = vadd.f32 %v1405, %v1473
      %v1506 = vadd.f32 %v1406, %v1474
      %v1507 = vadd.f32 %v1407, %v1475
      %v1508 = vadd.f32 %v1408, %v1476
      %v1509 = vadd.f32 %v1409, %v1477
      %v1510 = vadd.f32 %v1410, %v1478
      %v1511 = vld [vmem:[%s1310 + $0x9] sm:$0xff]
      %v1512 = vld [vmem:[%s1310 + $0x11] sm:$0xff]
      %v1513 = vld [vmem:[%s1310 + $0x29] sm:$0xff]
      %v1514 = vld [vmem:[%s1310 + $0x31] sm:$0xff]
      %v1515 = vld [vmem:[%s1310 + $0x49] sm:$0xff]
      %v1516 = vld [vmem:[%s1310 + $0x51] sm:$0xff]
      %v1517 = vld [vmem:[%s1310 + $0x69] sm:$0xff]
      %v1518 = vld [vmem:[%s1310 + $0x71] sm:$0xff]
      %v1519 = vld [vmem:[%s1310 + $0x89] sm:$0xff]
      %v1520 = vld [vmem:[%s1310 + $0x91] sm:$0xff]
      %v1521 = vld [vmem:[%s1310 + $0xa9] sm:$0xff]
      %v1522 = vld [vmem:[%s1310 + $0xb1] sm:$0xff]
      %v1523 = vld [vmem:[%s1310 + $0xc9] sm:$0xff]
      %v1524 = vld [vmem:[%s1310 + $0xd1] sm:$0xff]
      %v1525 = vld [vmem:[%s1310 + $0xe9] sm:$0xff]
      %v1526 = vld [vmem:[%s1310 + $0xf1] sm:$0xff]
      %v1527 = vld [vmem:[%s1310 + $0x109] sm:$0xff]
      %v1528 = vld [vmem:[%s1310 + $0x111] sm:$0xff]
      %v1529 = vld [vmem:[%s1310 + $0x129] sm:$0xff]
      %v1530 = vld [vmem:[%s1310 + $0x131] sm:$0xff]
      %v1531 = vld [vmem:[%s1310 + $0x149] sm:$0xff]
      %v1532 = vld [vmem:[%s1310 + $0x151] sm:$0xff]
      %v1533 = vld [vmem:[%s1310 + $0x169] sm:$0xff]
      %v1534 = vld [vmem:[%s1310 + $0x171] sm:$0xff]
      %v1535 = vld [vmem:[%s1310 + $0x189] sm:$0xff]
      %v1536 = vld [vmem:[%s1310 + $0x191] sm:$0xff]
      %v1537 = vld [vmem:[%s1310 + $0x1a9] sm:$0xff]
      %v1538 = vld [vmem:[%s1310 + $0x1b1] sm:$0xff]
      %v1539 = vld [vmem:[%s1310 + $0x1c9] sm:$0xff]
      %v1540 = vld [vmem:[%s1310 + $0x1d1] sm:$0xff]
      %v1541 = vld [vmem:[%s1310 + $0x1e9] sm:$0xff]
      %v1542 = vld [vmem:[%s1310 + $0x1f1] sm:$0xff]
      %v1543 = vlaneseq
      %v1544 = vshrl.u32 %v1543, 7
      %v1545 = vsub.s32 0, %v1544
      %v1546 = vrot.slane %v739, %v1545
      %v1547 = vmul.f32 %v1511, %v1546
      %v1548 = vmul.f32 %v1512, %v1546
      %v1549 = vmul.f32 %v1513, %v1546
      %v1550 = vmul.f32 %v1514, %v1546
      %v1551 = vmul.f32 %v1515, %v1546
      %v1552 = vmul.f32 %v1516, %v1546
      %v1553 = vmul.f32 %v1517, %v1546
      %v1554 = vmul.f32 %v1518, %v1546
      %v1555 = vmul.f32 %v1519, %v1546
      %v1556 = vmul.f32 %v1520, %v1546
      %v1557 = vmul.f32 %v1521, %v1546
      %v1558 = vmul.f32 %v1522, %v1546
      %v1559 = vmul.f32 %v1523, %v1546
      %v1560 = vmul.f32 %v1524, %v1546
      %v1561 = vmul.f32 %v1525, %v1546
      %v1562 = vmul.f32 %v1526, %v1546
      %v1563 = vmul.f32 %v1527, %v1546
      %v1564 = vmul.f32 %v1528, %v1546
      %v1565 = vmul.f32 %v1529, %v1546
      %v1566 = vmul.f32 %v1530, %v1546
      %v1567 = vmul.f32 %v1531, %v1546
      %v1568 = vmul.f32 %v1532, %v1546
      %v1569 = vmul.f32 %v1533, %v1546
      %v1570 = vmul.f32 %v1534, %v1546
      %v1571 = vmul.f32 %v1535, %v1546
      %v1572 = vmul.f32 %v1536, %v1546
      %v1573 = vmul.f32 %v1537, %v1546
      %v1574 = vmul.f32 %v1538, %v1546
      %v1575 = vmul.f32 %v1539, %v1546
      %v1576 = vmul.f32 %v1540, %v1546
      %v1577 = vmul.f32 %v1541, %v1546
      %v1578 = vmul.f32 %v1542, %v1546
      %v1579 = vadd.f32 %v1479, %v1547
      %v1580 = vadd.f32 %v1480, %v1548
      %v1581 = vadd.f32 %v1481, %v1549
      %v1582 = vadd.f32 %v1482, %v1550
      %v1583 = vadd.f32 %v1483, %v1551
      %v1584 = vadd.f32 %v1484, %v1552
      %v1585 = vadd.f32 %v1485, %v1553
      %v1586 = vadd.f32 %v1486, %v1554
      %v1587 = vadd.f32 %v1487, %v1555
      %v1588 = vadd.f32 %v1488, %v1556
      %v1589 = vadd.f32 %v1489, %v1557
      %v1590 = vadd.f32 %v1490, %v1558
      %v1591 = vadd.f32 %v1491, %v1559
      %v1592 = vadd.f32 %v1492, %v1560
      %v1593 = vadd.f32 %v1493, %v1561
      %v1594 = vadd.f32 %v1494, %v1562
      %v1595 = vadd.f32 %v1495, %v1563
      %v1596 = vadd.f32 %v1496, %v1564
      %v1597 = vadd.f32 %v1497, %v1565
      %v1598 = vadd.f32 %v1498, %v1566
      %v1599 = vadd.f32 %v1499, %v1567
      %v1600 = vadd.f32 %v1500, %v1568
      %v1601 = vadd.f32 %v1501, %v1569
      %v1602 = vadd.f32 %v1502, %v1570
      %v1603 = vadd.f32 %v1503, %v1571
      %v1604 = vadd.f32 %v1504, %v1572
      %v1605 = vadd.f32 %v1505, %v1573
      %v1606 = vadd.f32 %v1506, %v1574
      %v1607 = vadd.f32 %v1507, %v1575
      %v1608 = vadd.f32 %v1508, %v1576
      %v1609 = vadd.f32 %v1509, %v1577
      %v1610 = vadd.f32 %v1510, %v1578
      %v1611 = vld [vmem:[%s4] sm:$0x1]
      %v1613 = vlaneseq
      %v1614 = vshrl.u32 %v1613, 7
      %v1615 = vsub.s32 0, %v1614
      %v1616 = vrot.slane %v1611, %v1615
      %v1618 = vadd.f32 %v1579, %v1616
      %v1619 = vadd.f32 %v1580, %v1616
      %v1620 = vadd.f32 %v1581, %v1616
      %v1621 = vadd.f32 %v1582, %v1616
      %v1622 = vadd.f32 %v1583, %v1616
      %v1623 = vadd.f32 %v1584, %v1616
      %v1624 = vadd.f32 %v1585, %v1616
      %v1625 = vadd.f32 %v1586, %v1616
      %v1626 = vadd.f32 %v1587, %v1616
      %v1627 = vadd.f32 %v1588, %v1616
      %v1628 = vadd.f32 %v1589, %v1616
      %v1629 = vadd.f32 %v1590, %v1616
      %v1630 = vadd.f32 %v1591, %v1616
      %v1631 = vadd.f32 %v1592, %v1616
      %v1632 = vadd.f32 %v1593, %v1616
      %v1633 = vadd.f32 %v1594, %v1616
      %v1634 = vadd.f32 %v1595, %v1616
      %v1635 = vadd.f32 %v1596, %v1616
      %v1636 = vadd.f32 %v1597, %v1616
      %v1637 = vadd.f32 %v1598, %v1616
      %v1638 = vadd.f32 %v1599, %v1616
      %v1639 = vadd.f32 %v1600, %v1616
      %v1640 = vadd.f32 %v1601, %v1616
      %v1641 = vadd.f32 %v1602, %v1616
      %v1642 = vadd.f32 %v1603, %v1616
      %v1643 = vadd.f32 %v1604, %v1616
      %v1644 = vadd.f32 %v1605, %v1616
      %v1645 = vadd.f32 %v1606, %v1616
      %v1646 = vadd.f32 %v1607, %v1616
      %v1647 = vadd.f32 %v1608, %v1616
      %v1648 = vadd.f32 %v1609, %v1616
      %v1649 = vadd.f32 %v1610, %v1616
      %v1650 = vmax.f32 %v1618, 0.0
      %v1651 = vmax.f32 %v1619, 0.0
      %v1652 = vmax.f32 %v1620, 0.0
      %v1653 = vmax.f32 %v1621, 0.0
      %v1654 = vmax.f32 %v1622, 0.0
      %v1655 = vmax.f32 %v1623, 0.0
      %v1656 = vmax.f32 %v1624, 0.0
      %v1657 = vmax.f32 %v1625, 0.0
      %v1658 = vmax.f32 %v1626, 0.0
      %v1659 = vmax.f32 %v1627, 0.0
      %v1660 = vmax.f32 %v1628, 0.0
      %v1661 = vmax.f32 %v1629, 0.0
      %v1662 = vmax.f32 %v1630, 0.0
      %v1663 = vmax.f32 %v1631, 0.0
      %v1664 = vmax.f32 %v1632, 0.0
      %v1665 = vmax.f32 %v1633, 0.0
      %v1666 = vmax.f32 %v1634, 0.0
      %v1667 = vmax.f32 %v1635, 0.0
      %v1668 = vmax.f32 %v1636, 0.0
      %v1669 = vmax.f32 %v1637, 0.0
      %v1670 = vmax.f32 %v1638, 0.0
      %v1671 = vmax.f32 %v1639, 0.0
      %v1672 = vmax.f32 %v1640, 0.0
      %v1673 = vmax.f32 %v1641, 0.0
      %v1674 = vmax.f32 %v1642, 0.0
      %v1675 = vmax.f32 %v1643, 0.0
      %v1676 = vmax.f32 %v1644, 0.0
      %v1677 = vmax.f32 %v1645, 0.0
      %v1678 = vmax.f32 %v1646, 0.0
      %v1679 = vmax.f32 %v1647, 0.0
      %v1680 = vmax.f32 %v1648, 0.0
      %v1681 = vmax.f32 %v1649, 0.0
      %v1682 = vmin.f32 %v1650, 6.0
      %v1683 = vmin.f32 %v1651, 6.0
      %v1684 = vmin.f32 %v1652, 6.0
      %v1685 = vmin.f32 %v1653, 6.0
      %v1686 = vmin.f32 %v1654, 6.0
      %v1687 = vmin.f32 %v1655, 6.0
      %v1688 = vmin.f32 %v1656, 6.0
      %v1689 = vmin.f32 %v1657, 6.0
      %v1690 = vmin.f32 %v1658, 6.0
      %v1691 = vmin.f32 %v1659, 6.0
      %v1692 = vmin.f32 %v1660, 6.0
      %v1693 = vmin.f32 %v1661, 6.0
      %v1694 = vmin.f32 %v1662, 6.0
      %v1695 = vmin.f32 %v1663, 6.0
      %v1696 = vmin.f32 %v1664, 6.0
      %v1697 = vmin.f32 %v1665, 6.0
      %v1698 = vmin.f32 %v1666, 6.0
      %v1699 = vmin.f32 %v1667, 6.0
      %v1700 = vmin.f32 %v1668, 6.0
      %v1701 = vmin.f32 %v1669, 6.0
      %v1702 = vmin.f32 %v1670, 6.0
      %v1703 = vmin.f32 %v1671, 6.0
      %v1704 = vmin.f32 %v1672, 6.0
      %v1705 = vmin.f32 %v1673, 6.0
      %v1706 = vmin.f32 %v1674, 6.0
      %v1707 = vmin.f32 %v1675, 6.0
      %v1708 = vmin.f32 %v1676, 6.0
      %v1709 = vmin.f32 %v1677, 6.0
      %v1710 = vmin.f32 %v1678, 6.0
      %v1711 = vmin.f32 %v1679, 6.0
      %v1712 = vmin.f32 %v1680, 6.0
      %v1713 = vmin.f32 %v1681, 6.0
      %v1714 = vpack.c.bf16 %v1683, %v1682
      %v1715 = vpack.c.bf16 %v1685, %v1684
      %v1716 = vpack.c.bf16 %v1687, %v1686
      %v1717 = vpack.c.bf16 %v1689, %v1688
      %v1718 = vpack.c.bf16 %v1691, %v1690
      %v1719 = vpack.c.bf16 %v1693, %v1692
      %v1720 = vpack.c.bf16 %v1695, %v1694
      %v1721 = vpack.c.bf16 %v1697, %v1696
      %v1722 = vpack.c.bf16 %v1699, %v1698
      %v1723 = vpack.c.bf16 %v1701, %v1700
      %v1724 = vpack.c.bf16 %v1703, %v1702
      %v1725 = vpack.c.bf16 %v1705, %v1704
      %v1726 = vpack.c.bf16 %v1707, %v1706
      %v1727 = vpack.c.bf16 %v1709, %v1708
      %v1728 = vpack.c.bf16 %v1711, %v1710
      %v1729 = vpack.c.bf16 %v1713, %v1712
      %v1730 = vld [vmem:[%s5] sm:$0xf]
      %v1731 = vld [vmem:[%s5 + $0x4] sm:$0xf]
      %v1732 = vld [vmem:[%s5 + $0x8] sm:$0xf]
      %v1733 = vld [vmem:[%s5 + $0xc] sm:$0xf]
      %v1734 = vld [vmem:[%s5 + $0x10] sm:$0xf]
      %v1735 = vld [vmem:[%s5 + $0x14] sm:$0xf]
      %v1736 = vld [vmem:[%s6] sm:$0x1]
      %v1738 = vlaneseq
      %v1739 = vshrl.u32 %v1738, 7
      %v1740 = vsub.s32 0, %v1739
      %v1741 = vrot.slane %v1736, %v1740
      %v1749 = vunpack.c.l.b16 %v1730
      %v1750 = vunpack.c.l.b16 %v1731
      %v1751 = vunpack.c.l.b16 %v1732
      %v1752 = vunpack.c.l.b16 %v1733
      %v1753 = vunpack.c.l.b16 %v1734
      %v1754 = vunpack.c.l.b16 %v1735
      %v1755 = vpack.c.b16 %v1750, %v1749
      %v1756 = vpack.c.b16 %v1752, %v1751
      %v1757 = vpack.c.b16 %v1754, %v1753
      %v1762 = vsel %vm305, %v1714, 0
      %v1765 = vsel %vm305, %v1715, 0
      %v1768 = vsel %vm305, %v1716, 0
      %v1771 = vsel %vm305, %v1717, 0
      %v1774 = vsel %vm305, %v1718, 0
      %v1777 = vsel %vm305, %v1719, 0
      %v1780 = vsel %vm305, %v1720, 0
      %v1783 = vsel %vm305, %v1721, 0
      %v1786 = vsel %vm305, %v1722, 0
      %v1789 = vsel %vm305, %v1723, 0
      %v1792 = vsel %vm305, %v1724, 0
      %v1795 = vsel %vm305, %v1725, 0
      %v1798 = vsel %vm305, %v1726, 0
      %v1801 = vsel %vm305, %v1727, 0
      %v1804 = vsel %vm305, %v1728, 0
      %v1807 = vsel %vm305, %v1729, 0
      %1809 = vmatprep.subr.bf16.mxu0 0
      %1810 = vmatpush1.bf16.msra.mxu0 0
      %1811 = vmatprep.subr.bf16.mxu0 0
      %1812 = vmatpush1.bf16.msra.mxu0 0
      %1813 = vmatprep.subr.bf16.mxu0 0
      %1814 = vmatpush1.bf16.msra.mxu0 0
      %1815 = vmatprep.subr.bf16.mxu0 0
      %1816 = vmatpush1.bf16.msra.mxu0 0
      %1817 = vmatprep.subr.bf16.mxu0 0
      %1818 = vmatpush1.bf16.msra.mxu0 0
      %1819 = vmatprep.subr.bf16.mxu0 0
      %1820 = vmatpush1.bf16.msra.mxu0 %v1757
      %1821 = vmatprep.subr.bf16.mxu0 0
      %1822 = vmatpush1.bf16.msra.mxu0 %v1756
      %1823 = vmatprep.subr.bf16.mxu0 0
      %1824 = vmatpush1.bf16.msra.mxu0 %v1755
      %1825 = vmatprep.subr.bf16.mxu0 0
      %1826 = vmatpush2.bf16.msra.mxu0 0
      %1827 = vmatprep.subr.bf16.mxu0 0
      %1828 = vmatpush2.bf16.msra.mxu0 0
      %1829 = vmatprep.subr.bf16.mxu0 0
      %1830 = vmatpush2.bf16.msra.mxu0 0
      %1831 = vmatprep.subr.bf16.mxu0 0
      %1832 = vmatpush2.bf16.msra.mxu0 0
      %1833 = vmatprep.subr.bf16.mxu0 0
      %1834 = vmatpush2.bf16.msra.mxu0 0
      %1835 = vmatprep.subr.bf16.mxu0 0
      %1836 = vmatpush2.bf16.msra.mxu0 0
      %1837 = vmatprep.subr.bf16.mxu0 0
      %1838 = vmatpush2.bf16.msra.mxu0 0
      %1839 = vmatprep.subr.bf16.mxu0 0
      %1840 = vmatpush2.bf16.msra.mxu0 0
      %1841 = vmatprep.mubr.bf16.mxu0 0
      %1842 = vmatmul.mubr.bf16.gmra.mxu0 %v1762
      %v1843 = vpop.f32.mrf.mxu0
      %v1844 = vadd.f32 %v1741, %v1843
      %v1845 = vpop.f32.mrf.mxu0
      %v1846 = vpop.f32.mrf.mxu0
      %v1847 = vadd.f32 %v1741, %v1846
      %v1848 = vpop.f32.mrf.mxu0
      %1849 = vmatprep.mubr.bf16.mxu0 0
      %1850 = vmatmul.mubr.bf16.gmra.mxu0 %v1765
      %v1851 = vpop.f32.mrf.mxu0
      %v1852 = vadd.f32 %v1741, %v1851
      %v1853 = vpop.f32.mrf.mxu0
      %v1854 = vpop.f32.mrf.mxu0
      %v1855 = vadd.f32 %v1741, %v1854
      %v1856 = vpop.f32.mrf.mxu0
      %1857 = vmatprep.mubr.bf16.mxu0 0
      %1858 = vmatmul.mubr.bf16.gmra.mxu0 %v1768
      %v1859 = vpop.f32.mrf.mxu0
      %v1860 = vadd.f32 %v1741, %v1859
      %v1861 = vpop.f32.mrf.mxu0
      %v1862 = vpop.f32.mrf.mxu0
      %v1863 = vadd.f32 %v1741, %v1862
      %v1864 = vpop.f32.mrf.mxu0
      %1865 = vmatprep.mubr.bf16.mxu0 0
      %1866 = vmatmul.mubr.bf16.gmra.mxu0 %v1771
      %v1867 = vpop.f32.mrf.mxu0
      %v1868 = vadd.f32 %v1741, %v1867
      %v1869 = vpop.f32.mrf.mxu0
      %v1870 = vpop.f32.mrf.mxu0
      %v1871 = vadd.f32 %v1741, %v1870
      %v1872 = vpop.f32.mrf.mxu0
      %1873 = vmatprep.mubr.bf16.mxu0 0
      %1874 = vmatmul.mubr.bf16.gmra.mxu0 %v1774
      %v1875 = vpop.f32.mrf.mxu0
      %v1876 = vadd.f32 %v1741, %v1875
      %v1877 = vpop.f32.mrf.mxu0
      %v1878 = vpop.f32.mrf.mxu0
      %v1879 = vadd.f32 %v1741, %v1878
      %v1880 = vpop.f32.mrf.mxu0
      %1881 = vmatprep.mubr.bf16.mxu0 0
      %1882 = vmatmul.mubr.bf16.gmra.mxu0 %v1777
      %v1883 = vpop.f32.mrf.mxu0
      %v1884 = vadd.f32 %v1741, %v1883
      %v1885 = vpop.f32.mrf.mxu0
      %v1886 = vpop.f32.mrf.mxu0
      %v1887 = vadd.f32 %v1741, %v1886
      %v1888 = vpop.f32.mrf.mxu0
      %1889 = vmatprep.mubr.bf16.mxu0 0
      %1890 = vmatmul.mubr.bf16.gmra.mxu0 %v1780
      %v1891 = vpop.f32.mrf.mxu0
      %v1892 = vadd.f32 %v1741, %v1891
      %v1893 = vpop.f32.mrf.mxu0
      %v1894 = vpop.f32.mrf.mxu0
      %v1895 = vadd.f32 %v1741, %v1894
      %v1896 = vpop.f32.mrf.mxu0
      %1897 = vmatprep.mubr.bf16.mxu0 0
      %1898 = vmatmul.mubr.bf16.gmra.mxu0 %v1783
      %v1899 = vpop.f32.mrf.mxu0
      %v1900 = vadd.f32 %v1741, %v1899
      %v1901 = vpop.f32.mrf.mxu0
      %v1902 = vpop.f32.mrf.mxu0
      %v1903 = vadd.f32 %v1741, %v1902
      %v1904 = vpop.f32.mrf.mxu0
      %1905 = vmatprep.mubr.bf16.mxu0 0
      %1906 = vmatmul.mubr.bf16.gmra.mxu0 %v1786
      %v1907 = vpop.f32.mrf.mxu0
      %v1908 = vadd.f32 %v1741, %v1907
      %v1909 = vpop.f32.mrf.mxu0
      %v1910 = vpop.f32.mrf.mxu0
      %v1911 = vadd.f32 %v1741, %v1910
      %v1912 = vpop.f32.mrf.mxu0
      %1913 = vmatprep.mubr.bf16.mxu0 0
      %1914 = vmatmul.mubr.bf16.gmra.mxu0 %v1789
      %v1915 = vpop.f32.mrf.mxu0
      %v1916 = vadd.f32 %v1741, %v1915
      %v1917 = vpop.f32.mrf.mxu0
      %v1918 = vpop.f32.mrf.mxu0
      %v1919 = vadd.f32 %v1741, %v1918
      %v1920 = vpop.f32.mrf.mxu0
      %1921 = vmatprep.mubr.bf16.mxu0 0
      %1922 = vmatmul.mubr.bf16.gmra.mxu0 %v1792
      %v1923 = vpop.f32.mrf.mxu0
      %v1924 = vadd.f32 %v1741, %v1923
      %v1925 = vpop.f32.mrf.mxu0
      %v1926 = vpop.f32.mrf.mxu0
      %v1927 = vadd.f32 %v1741, %v1926
      %v1928 = vpop.f32.mrf.mxu0
      %1929 = vmatprep.mubr.bf16.mxu0 0
      %1930 = vmatmul.mubr.bf16.gmra.mxu0 %v1795
      %v1931 = vpop.f32.mrf.mxu0
      %v1932 = vadd.f32 %v1741, %v1931
      %v1933 = vpop.f32.mrf.mxu0
      %v1934 = vpop.f32.mrf.mxu0
      %v1935 = vadd.f32 %v1741, %v1934
      %v1936 = vpop.f32.mrf.mxu0
      %1937 = vmatprep.mubr.bf16.mxu0 0
      %1938 = vmatmul.mubr.bf16.gmra.mxu0 %v1798
      %v1939 = vpop.f32.mrf.mxu0
      %v1940 = vadd.f32 %v1741, %v1939
      %v1941 = vpop.f32.mrf.mxu0
      %v1942 = vpop.f32.mrf.mxu0
      %v1943 = vadd.f32 %v1741, %v1942
      %v1944 = vpop.f32.mrf.mxu0
      %1945 = vmatprep.mubr.bf16.mxu0 0
      %1946 = vmatmul.mubr.bf16.gmra.mxu0 %v1801
      %v1947 = vpop.f32.mrf.mxu0
      %v1948 = vadd.f32 %v1741, %v1947
      %v1949 = vpop.f32.mrf.mxu0
      %v1950 = vpop.f32.mrf.mxu0
      %v1951 = vadd.f32 %v1741, %v1950
      %v1952 = vpop.f32.mrf.mxu0
      %1953 = vmatprep.mubr.bf16.mxu0 0
      %1954 = vmatmul.mubr.bf16.gmra.mxu0 %v1804
      %v1955 = vpop.f32.mrf.mxu0
      %v1956 = vadd.f32 %v1741, %v1955
      %v1957 = vpop.f32.mrf.mxu0
      %v1958 = vpop.f32.mrf.mxu0
      %v1959 = vadd.f32 %v1741, %v1958
      %v1960 = vpop.f32.mrf.mxu0
      %1961 = vmatprep.mubr.bf16.mxu0 0
      %1962 = vmatmul.mubr.bf16.gmra.mxu0 %v1807
      %v1963 = vpop.f32.mrf.mxu0
      %v1964 = vadd.f32 %v1741, %v1963
      %v1965 = vpop.f32.mrf.mxu0
      %v1966 = vpop.f32.mrf.mxu0
      %v1967 = vadd.f32 %v1741, %v1966
      %v1968 = vpop.f32.mrf.mxu0
      %1969 = vdwg.mxu0
      %s1970 = smul.u32 %s346, 16
      %s1971 = scalar_lea.vmem %s292, %s1970
      %v1972 = vld [vmem:[%s1971] sm:$0xff]
      %v1973 = vld [vmem:[%s1971 + $0x8] sm:$0xff]
      %v1974 = vld [vmem:[%s1971 + $0x10] sm:$0xff]
      %v1975 = vld [vmem:[%s1971 + $0x18] sm:$0xff]
      %v1976 = vld [vmem:[%s1971 + $0x20] sm:$0xff]
      %v1977 = vld [vmem:[%s1971 + $0x28] sm:$0xff]
      %v1978 = vld [vmem:[%s1971 + $0x30] sm:$0xff]
      %v1979 = vld [vmem:[%s1971 + $0x38] sm:$0xff]
      %v1980 = vld [vmem:[%s1971 + $0x40] sm:$0xff]
      %v1981 = vld [vmem:[%s1971 + $0x48] sm:$0xff]
      %v1982 = vld [vmem:[%s1971 + $0x50] sm:$0xff]
      %v1983 = vld [vmem:[%s1971 + $0x58] sm:$0xff]
      %v1984 = vld [vmem:[%s1971 + $0x60] sm:$0xff]
      %v1985 = vld [vmem:[%s1971 + $0x68] sm:$0xff]
      %v1986 = vld [vmem:[%s1971 + $0x70] sm:$0xff]
      %v1987 = vld [vmem:[%s1971 + $0x78] sm:$0xff]
      %v1988 = vld [vmem:[%s1971 + $0x80] sm:$0xff]
      %v1989 = vld [vmem:[%s1971 + $0x88] sm:$0xff]
      %v1990 = vld [vmem:[%s1971 + $0x90] sm:$0xff]
      %v1991 = vld [vmem:[%s1971 + $0x98] sm:$0xff]
      %v1992 = vld [vmem:[%s1971 + $0xa0] sm:$0xff]
      %v1993 = vld [vmem:[%s1971 + $0xa8] sm:$0xff]
      %v1994 = vld [vmem:[%s1971 + $0xb0] sm:$0xff]
      %v1995 = vld [vmem:[%s1971 + $0xb8] sm:$0xff]
      %v1996 = vld [vmem:[%s1971 + $0xc0] sm:$0xff]
      %v1997 = vld [vmem:[%s1971 + $0xc8] sm:$0xff]
      %v1998 = vld [vmem:[%s1971 + $0xd0] sm:$0xff]
      %v1999 = vld [vmem:[%s1971 + $0xd8] sm:$0xff]
      %v2000 = vld [vmem:[%s1971 + $0xe0] sm:$0xff]
      %v2001 = vld [vmem:[%s1971 + $0xe8] sm:$0xff]
      %v2002 = vld [vmem:[%s1971 + $0xf0] sm:$0xff]
      %v2003 = vld [vmem:[%s1971 + $0xf8] sm:$0xff]
      %v2004 = vadd.f32 %v1844, %v1972
      %v2005 = vadd.f32 %v1847, %v1973
      %v2006 = vadd.f32 %v1852, %v1974
      %v2007 = vadd.f32 %v1855, %v1975
      %v2008 = vadd.f32 %v1860, %v1976
      %v2009 = vadd.f32 %v1863, %v1977
      %v2010 = vadd.f32 %v1868, %v1978
      %v2011 = vadd.f32 %v1871, %v1979
      %v2012 = vadd.f32 %v1876, %v1980
      %v2013 = vadd.f32 %v1879, %v1981
      %v2014 = vadd.f32 %v1884, %v1982
      %v2015 = vadd.f32 %v1887, %v1983
      %v2016 = vadd.f32 %v1892, %v1984
      %v2017 = vadd.f32 %v1895, %v1985
      %v2018 = vadd.f32 %v1900, %v1986
      %v2019 = vadd.f32 %v1903, %v1987
      %v2020 = vadd.f32 %v1908, %v1988
      %v2021 = vadd.f32 %v1911, %v1989
      %v2022 = vadd.f32 %v1916, %v1990
      %v2023 = vadd.f32 %v1919, %v1991
      %v2024 = vadd.f32 %v1924, %v1992
      %v2025 = vadd.f32 %v1927, %v1993
      %v2026 = vadd.f32 %v1932, %v1994
      %v2027 = vadd.f32 %v1935, %v1995
      %v2028 = vadd.f32 %v1940, %v1996
      %v2029 = vadd.f32 %v1943, %v1997
      %v2030 = vadd.f32 %v1948, %v1998
      %v2031 = vadd.f32 %v1951, %v1999
      %v2032 = vadd.f32 %v1956, %v2000
      %v2033 = vadd.f32 %v1959, %v2001
      %v2034 = vadd.f32 %v1964, %v2002
      %v2035 = vadd.f32 %v1967, %v2003
      %2036 = vst.msk [vmem:[%s302] sm:$0xff] %vm410, %v2004
      %2037 = vst.msk [vmem:[%s302 + $0x8] sm:$0xff] %vm410, %v2005
      %2038 = vst.msk [vmem:[%s302 + $0x10] sm:$0xff] %vm410, %v2006
      %2039 = vst.msk [vmem:[%s302 + $0x18] sm:$0xff] %vm410, %v2007
      %2040 = vst.msk [vmem:[%s302 + $0x20] sm:$0xff] %vm410, %v2008
      %2041 = vst.msk [vmem:[%s302 + $0x28] sm:$0xff] %vm410, %v2009
      %2042 = vst.msk [vmem:[%s302 + $0x30] sm:$0xff] %vm410, %v2010
      %2043 = vst.msk [vmem:[%s302 + $0x38] sm:$0xff] %vm410, %v2011
      %2044 = vst.msk [vmem:[%s302 + $0x40] sm:$0xff] %vm410, %v2012
      %2045 = vst.msk [vmem:[%s302 + $0x48] sm:$0xff] %vm410, %v2013
      %2046 = vst.msk [vmem:[%s302 + $0x50] sm:$0xff] %vm410, %v2014
      %2047 = vst.msk [vmem:[%s302 + $0x58] sm:$0xff] %vm410, %v2015
      %2048 = vst.msk [vmem:[%s302 + $0x60] sm:$0xff] %vm410, %v2016
      %2049 = vst.msk [vmem:[%s302 + $0x68] sm:$0xff] %vm410, %v2017
      %2050 = vst.msk [vmem:[%s302 + $0x70] sm:$0xff] %vm410, %v2018
      %2051 = vst.msk [vmem:[%s302 + $0x78] sm:$0xff] %vm410, %v2019
      %2052 = vst.msk [vmem:[%s302 + $0x80] sm:$0xff] %vm410, %v2020
      %2053 = vst.msk [vmem:[%s302 + $0x88] sm:$0xff] %vm410, %v2021
      %2054 = vst.msk [vmem:[%s302 + $0x90] sm:$0xff] %vm410, %v2022
      %2055 = vst.msk [vmem:[%s302 + $0x98] sm:$0xff] %vm410, %v2023
      %2056 = vst.msk [vmem:[%s302 + $0xa0] sm:$0xff] %vm410, %v2024
      %2057 = vst.msk [vmem:[%s302 + $0xa8] sm:$0xff] %vm410, %v2025
      %2058 = vst.msk [vmem:[%s302 + $0xb0] sm:$0xff] %vm410, %v2026
      %2059 = vst.msk [vmem:[%s302 + $0xb8] sm:$0xff] %vm410, %v2027
      %2060 = vst.msk [vmem:[%s302 + $0xc0] sm:$0xff] %vm410, %v2028
      %2061 = vst.msk [vmem:[%s302 + $0xc8] sm:$0xff] %vm410, %v2029
      %2062 = vst.msk [vmem:[%s302 + $0xd0] sm:$0xff] %vm410, %v2030
      %2063 = vst.msk [vmem:[%s302 + $0xd8] sm:$0xff] %vm410, %v2031
      %2064 = vst.msk [vmem:[%s302 + $0xe0] sm:$0xff] %vm410, %v2032
      %2065 = vst.msk [vmem:[%s302 + $0xe8] sm:$0xff] %vm410, %v2033
      %2066 = vst.msk [vmem:[%s302 + $0xf0] sm:$0xff] %vm410, %v2034
      %2067 = vst.msk [vmem:[%s302 + $0xf8] sm:$0xff] %vm410, %v2035
      %s2068 = smul.u32 16, %s23
      %p2069 = scmp.lt.s32.totalorder %s22, 1
      %s2070 = scalar_select %p2069, %s22, 1
      %p2071 = scmp.lt.s32.totalorder %s2068, 15
      %s2072 = scalar_select %p2071, %s2068, 15
      %s2073 = smul.addr %s2072, 2
      %s2074 = smul.addr %s2070, 32
      %s2075 = sadd.s32 %s2073, %s2074
      %s2076 = smul.addr %s2075, 8
      %s2077 = scalar_lea.vmem %s7, %s2076
      // Predicated region
      $region53: #{mixed_mobile_convs_forward.1} parent=47 // pred_check
        %p2078 = pneg %p202
      $region54: #{mixed_mobile_convs_forward.1} parent=47 // pred_check_branch
        %2080 = sbr.rel (%p2078) target = $region56
      $region55: #{mixed_mobile_convs_forward.1} parent=47 // pred_region
        %s2081 = smul.u32 16, %s23
      $region56: #{mixed_mobile_convs_forward.1} parent=47 // pred_fallthru
        _
    $region48: #{mixed_mobile_convs_forward.1} parent=5 // pred_fallthru
      _
    %p2082 = scmp.le.s32.totalorder 2, %s13
    // Predicated region
    $region57: #{mixed_mobile_convs_forward.1} parent=5 // pred_check
      %p2083 = pneg %p2082
    $region58: #{mixed_mobile_convs_forward.1} parent=5 // pred_check_branch
      %2085 = sbr.rel (%p2083) target = $region60
    $region59: #{mixed_mobile_convs_forward.1} parent=5 // pred_region
      %s2086 = ssub.s32 %s13, 2
      // Predicated region
      $region61: #{mixed_mobile_convs_forward.1} parent=59 // pred_check
        %p2087 = pneg %p208
      $region62: #{mixed_mobile_convs_forward.1} parent=59 // pred_check_branch
        %2089 = sbr.rel (%p2087) target = $region64
      $region63: #{mixed_mobile_convs_forward.1} parent=59 // pred_region
        %s2090 = smul.u32 16, %s25
        %p2091 = scmp.lt.s32.totalorder %s24, 1
        %s2092 = scalar_select %p2091, %s24, 1
        %p2093 = scmp.lt.s32.totalorder %s2090, 15
        %s2094 = scalar_select %p2093, %s2090, 15
        %s2095 = smul.addr %s2094, 2
        %s2096 = smul.addr %s2092, 32
        %s2097 = sadd.s32 %s2095, %s2096
        %s2098 = smul.addr %s2097, 8
        %s2099 = scalar_lea.vmem %s7, %s2098
      $region64: #{mixed_mobile_convs_forward.1} parent=59 // pred_fallthru
        _
    $region60: #{mixed_mobile_convs_forward.1} parent=5 // pred_fallthru
      _
  $region6: #{mixed_mobile_convs_forward.1} parent=0 // loop_footer
    %s17 = sadd.s32 1, %s13
  $region7: #{mixed_mobile_convs_forward.1} parent=0 // loop_footer_branch
    %12 = sbr.rel target = $region3
  $region8: #{mixed_mobile_convs_forward.1} parent=0 // loop_exit
    _

</llo_original>
